<compile_context>
chip_gen: v5e
topology: v5e:2x2
jax: 0.10.0
libtpu: 0.0.40
codegen_flags: <defaults>
</compile_context>

<pallas_src>
import jax
import jax.numpy as jnp
import numpy as np
from jax import lax
from jax.experimental import pallas as pl
from jax.experimental.pallas import tpu as pltpu

C_IN = 192
C_OUT = 48
H = 7
W = 7
KH = 3
KW = 3
PAD = 1

HW = H * W          # 49 spatial positions (row-major lanes)
LANES = 128         # lane-dense working width


def _build_tap_mask():
    """(9, 128) f32 0/1 mask: tap t=(kh*3+kw) contributes to output lane q=r*7+c
       iff the source pixel (r+kh-1, c+kw-1) is inside the 7x7 image."""
    m = np.zeros((KH * KW, LANES), np.float32)
    for kh in range(KH):
        for kw in range(KW):
            dh, dw = kh - PAD, kw - PAD
            t = kh * KW + kw
            for r in range(H):
                for c in range(W):
                    if 0 <= r + dh < H and 0 <= c + dw < W:
                        m[t, r * W + c] = 1.0
    return m


_TAP_MASK = _build_tap_mask()


def conv3x3_kernel(x_ref, w_ref, m_ref, o_ref):
    """x_ref: (C_IN, HW)   f32  channels-major input, spatial row-major
       w_ref: (9, C_OUT, C_IN) bf16  per-tap weights
       m_ref: (9, LANES)   f32  per-tap boundary masks (0/1)
       o_ref: (C_OUT, LANES) f32  output; lanes [0, HW) valid."""
    x = x_ref[...]                                                    # (192, 49)
    # Widen to a lane-dense 128-wide value (lanes >= 49 are never used unmasked).
    xw = jnp.concatenate(
        [x, jnp.zeros((C_IN, LANES - HW), jnp.float32)], axis=1)      # (192, 128)
    masks = m_ref[...]                                                # (9, 128)

    acc = jnp.zeros((C_OUT, LANES), jnp.float32)
    for kh in range(KH):
        for kw in range(KW):
            t = kh * KW + kw
            s = (kh - PAD) * W + (kw - PAD)      # source lane offset for this tap
            shifted = xw if s == 0 else pltpu.roll(xw, shift=(-s) % LANES, axis=1)
            tap = (shifted * masks[t:t + 1, :]).astype(jnp.bfloat16)  # (192, 128)
            acc = acc + jnp.dot(w_ref[t], tap,
                                preferred_element_type=jnp.float32)   # (48, 128)
    o_ref[...] = acc


def prepare_weight(weight_oihw):
    """One-time (init-time) transform: OIHW (48,192,3,3) -> (9,48,192) bf16,
       tap-major, matching the kernel's per-tap dots."""
    assert weight_oihw.shape == (C_OUT, C_IN, KH, KW)
    w = jnp.transpose(weight_oihw, (2, 3, 0, 1))          # (KH, KW, O, I)
    return w.reshape(KH * KW, C_OUT, C_IN).astype(jnp.bfloat16)


@jax.jit
def conv2d_forward(x_nchw, w_prep):
    """x_nchw: (1, 192, 7, 7) f32; w_prep: (9, 48, 192) bf16 -> (1, 48, 7, 7) f32"""
    x_cm = x_nchw.reshape(C_IN, HW)          # free reshape, no transpose
    tap_mask = jnp.asarray(_TAP_MASK)

    out = pl.pallas_call(
        conv3x3_kernel,
        out_shape=jax.ShapeDtypeStruct((C_OUT, LANES), jnp.float32),
        in_specs=[
            pl.BlockSpec(memory_space=pltpu.MemorySpace.VMEM),
            pl.BlockSpec(memory_space=pltpu.MemorySpace.VMEM),
            pl.BlockSpec(memory_space=pltpu.MemorySpace.VMEM),
        ],
        out_specs=pl.BlockSpec(memory_space=pltpu.MemorySpace.VMEM),
    )(x_cm, w_prep, tap_mask)

    # (48, 128) -> keep the 49 valid lanes -> (1, 48, 7, 7)
    return out[:, :HW].reshape(C_OUT, H, W)[None].astype(x_nchw.dtype)


if __name__ == "__main__":
    key = jax.random.PRNGKey(0)
    kx, kw_ = jax.random.split(key)
    x = jax.random.normal(kx, (1, C_IN, H, W), dtype=jnp.float32)
    # Deterministic synthetic Conv2d weights (OIHW, bias=False)
    weight = jax.random.normal(kw_, (C_OUT, C_IN, KH, KW), dtype=jnp.float32) * 0.05

    w_prep = prepare_weight(weight)          # hoisted constant transform (bf16)
    out = conv2d_forward(x, w_prep)
    out = jax.block_until_ready(out)

    # Reference check against XLA conv (NCHW / OIHW, stride 1, pad 1), f32
    ref = lax.conv_general_dilated(
        x, weight, window_strides=(1, 1), padding=((PAD, PAD), (PAD, PAD)),
        dimension_numbers=("NCHW", "OIHW", "NCHW"))
    ref = jax.block_until_ready(ref)

    assert out.shape == (1, C_OUT, H, W), out.shape
    max_err = float(jnp.max(jnp.abs(out - ref)))
    # bf16 operands with f32 accumulation over K=1728: expected |err| << 5e-2
    assert max_err < 5e-2, max_err
    print("KERNEL_OK")
</pallas_src>

<mosaic_0001>
module attributes {stable_mosaic.version = 11 : i64} {
  func.func @conv3x3_kernel(%arg0: memref<192x49xf32, #tpu.memory_space<vmem>>, %arg1: memref<9x48x192xbf16, #tpu.memory_space<vmem>>, %arg2: memref<9x128xf32, #tpu.memory_space<vmem>>, %arg3: memref<48x128xf32, #tpu.memory_space<vmem>>) attributes {dimension_semantics = [], scalar_prefetch = 0 : i64, scratch_operands = 0 : i64, tpu.core_type = #tpu.core_type<tc>} {
    %c0 = arith.constant 0 : index
    %c0_0 = arith.constant 0 : index
    %0 = vector.load %arg0[%c0, %c0_0] : memref<192x49xf32, #tpu.memory_space<vmem>>, vector<192x49xf32>
    %cst = arith.constant 0.000000e+00 : f32
    %1 = vector.broadcast %cst : f32 to vector<192x79xf32>
    %2 = tpu.concatenate %0, %1 in 1 : vector<192x49xf32>, vector<192x79xf32> -> vector<192x128xf32>
    %c0_1 = arith.constant 0 : index
    %c0_2 = arith.constant 0 : index
    %3 = vector.load %arg2[%c0_1, %c0_2] : memref<9x128xf32, #tpu.memory_space<vmem>>, vector<9x128xf32>
    %cst_3 = arith.constant 0.000000e+00 : f32
    %4 = vector.broadcast %cst_3 : f32 to vector<48x128xf32>
    %c8_i32 = arith.constant 8 : i32
    %5 = tpu.dynamic_rotate %2 by %c8_i32 dim 1 : vector<192x128xf32>, i32 -> vector<192x128xf32>
    %6 = vector.extract_strided_slice %3 {offsets = [0, 0], sizes = [1, 128], strides = [1, 1]} : vector<9x128xf32> to vector<1x128xf32>
    %7 = vector.broadcast %6 : vector<1x128xf32> to vector<192x128xf32>
    %8 = arith.mulf %5, %7 : vector<192x128xf32>
    %9 = arith.truncf %8 : vector<192x128xf32> to vector<192x128xbf16>
    %c0_4 = arith.constant 0 : index
    %c0_5 = arith.constant 0 : index
    %c0_6 = arith.constant 0 : index
    %10 = vector.load %arg1[%c0_4, %c0_5, %c0_6] : memref<9x48x192xbf16, #tpu.memory_space<vmem>>, vector<1x48x192xbf16>
    %11 = vector.shape_cast %10 : vector<1x48x192xbf16> to vector<48x192xbf16>
    %cst_7 = arith.constant dense<0.000000e+00> : vector<48x128xf32>
    %12 = tpu.matmul %11, %9, %cst_7 {dimension_numbers = #tpu.dot_dimension_numbers<[1], [0], [0], [1], [0, 0, 1, 1], [], []>} : vector<48x192xbf16>, vector<192x128xbf16>, vector<48x128xf32> -> vector<48x128xf32>
    %13 = arith.addf %4, %12 : vector<48x128xf32>
    %c7_i32 = arith.constant 7 : i32
    %14 = tpu.dynamic_rotate %2 by %c7_i32 dim 1 : vector<192x128xf32>, i32 -> vector<192x128xf32>
    %15 = vector.extract_strided_slice %3 {offsets = [1, 0], sizes = [1, 128], strides = [1, 1]} : vector<9x128xf32> to vector<1x128xf32>
    %16 = vector.broadcast %15 : vector<1x128xf32> to vector<192x128xf32>
    %17 = arith.mulf %14, %16 : vector<192x128xf32>
    %18 = arith.truncf %17 : vector<192x128xf32> to vector<192x128xbf16>
    %c1 = arith.constant 1 : index
    %c0_8 = arith.constant 0 : index
    %c0_9 = arith.constant 0 : index
    %19 = vector.load %arg1[%c1, %c0_8, %c0_9] : memref<9x48x192xbf16, #tpu.memory_space<vmem>>, vector<1x48x192xbf16>
    %20 = vector.shape_cast %19 : vector<1x48x192xbf16> to vector<48x192xbf16>
    %cst_10 = arith.constant dense<0.000000e+00> : vector<48x128xf32>
    %21 = tpu.matmul %20, %18, %cst_10 {dimension_numbers = #tpu.dot_dimension_numbers<[1], [0], [0], [1], [0, 0, 1, 1], [], []>} : vector<48x192xbf16>, vector<192x128xbf16>, vector<48x128xf32> -> vector<48x128xf32>
    %22 = arith.addf %13, %21 : vector<48x128xf32>
    %c6_i32 = arith.constant 6 : i32
    %23 = tpu.dynamic_rotate %2 by %c6_i32 dim 1 : vector<192x128xf32>, i32 -> vector<192x128xf32>
    %24 = vector.extract_strided_slice %3 {offsets = [2, 0], sizes = [1, 128], strides = [1, 1]} : vector<9x128xf32> to vector<1x128xf32>
    %25 = vector.broadcast %24 : vector<1x128xf32> to vector<192x128xf32>
    %26 = arith.mulf %23, %25 : vector<192x128xf32>
    %27 = arith.truncf %26 : vector<192x128xf32> to vector<192x128xbf16>
    %c2 = arith.constant 2 : index
    %c0_11 = arith.constant 0 : index
    %c0_12 = arith.constant 0 : index
    %28 = vector.load %arg1[%c2, %c0_11, %c0_12] : memref<9x48x192xbf16, #tpu.memory_space<vmem>>, vector<1x48x192xbf16>
    %29 = vector.shape_cast %28 : vector<1x48x192xbf16> to vector<48x192xbf16>
    %cst_13 = arith.constant dense<0.000000e+00> : vector<48x128xf32>
    %30 = tpu.matmul %29, %27, %cst_13 {dimension_numbers = #tpu.dot_dimension_numbers<[1], [0], [0], [1], [0, 0, 1, 1], [], []>} : vector<48x192xbf16>, vector<192x128xbf16>, vector<48x128xf32> -> vector<48x128xf32>
    %31 = arith.addf %22, %30 : vector<48x128xf32>
    %c1_i32 = arith.constant 1 : i32
    %32 = tpu.dynamic_rotate %2 by %c1_i32 dim 1 : vector<192x128xf32>, i32 -> vector<192x128xf32>
    %33 = vector.extract_strided_slice %3 {offsets = [3, 0], sizes = [1, 128], strides = [1, 1]} : vector<9x128xf32> to vector<1x128xf32>
    %34 = vector.broadcast %33 : vector<1x128xf32> to vector<192x128xf32>
    %35 = arith.mulf %32, %34 : vector<192x128xf32>
    %36 = arith.truncf %35 : vector<192x128xf32> to vector<192x128xbf16>
    %c3 = arith.constant 3 : index
    %c0_14 = arith.constant 0 : index
    %c0_15 = arith.constant 0 : index
    %37 = vector.load %arg1[%c3, %c0_14, %c0_15] : memref<9x48x192xbf16, #tpu.memory_space<vmem>>, vector<1x48x192xbf16>
    %38 = vector.shape_cast %37 : vector<1x48x192xbf16> to vector<48x192xbf16>
    %cst_16 = arith.constant dense<0.000000e+00> : vector<48x128xf32>
    %39 = tpu.matmul %38, %36, %cst_16 {dimension_numbers = #tpu.dot_dimension_numbers<[1], [0], [0], [1], [0, 0, 1, 1], [], []>} : vector<48x192xbf16>, vector<192x128xbf16>, vector<48x128xf32> -> vector<48x128xf32>
    %40 = arith.addf %31, %39 : vector<48x128xf32>
    %41 = vector.extract_strided_slice %3 {offsets = [4, 0], sizes = [1, 128], strides = [1, 1]} : vector<9x128xf32> to vector<1x128xf32>
    %42 = vector.broadcast %41 : vector<1x128xf32> to vector<192x128xf32>
    %43 = arith.mulf %2, %42 : vector<192x128xf32>
    %44 = arith.truncf %43 : vector<192x128xf32> to vector<192x128xbf16>
    %c4 = arith.constant 4 : index
    %c0_17 = arith.constant 0 : index
    %c0_18 = arith.constant 0 : index
    %45 = vector.load %arg1[%c4, %c0_17, %c0_18] : memref<9x48x192xbf16, #tpu.memory_space<vmem>>, vector<1x48x192xbf16>
    %46 = vector.shape_cast %45 : vector<1x48x192xbf16> to vector<48x192xbf16>
    %cst_19 = arith.constant dense<0.000000e+00> : vector<48x128xf32>
    %47 = tpu.matmul %46, %44, %cst_19 {dimension_numbers = #tpu.dot_dimension_numbers<[1], [0], [0], [1], [0, 0, 1, 1], [], []>} : vector<48x192xbf16>, vector<192x128xbf16>, vector<48x128xf32> -> vector<48x128xf32>
    %48 = arith.addf %40, %47 : vector<48x128xf32>
    %c127_i32 = arith.constant 127 : i32
    %49 = tpu.dynamic_rotate %2 by %c127_i32 dim 1 : vector<192x128xf32>, i32 -> vector<192x128xf32>
    %50 = vector.extract_strided_slice %3 {offsets = [5, 0], sizes = [1, 128], strides = [1, 1]} : vector<9x128xf32> to vector<1x128xf32>
    %51 = vector.broadcast %50 : vector<1x128xf32> to vector<192x128xf32>
    %52 = arith.mulf %49, %51 : vector<192x128xf32>
    %53 = arith.truncf %52 : vector<192x128xf32> to vector<192x128xbf16>
    %c5 = arith.constant 5 : index
    %c0_20 = arith.constant 0 : index
    %c0_21 = arith.constant 0 : index
    %54 = vector.load %arg1[%c5, %c0_20, %c0_21] : memref<9x48x192xbf16, #tpu.memory_space<vmem>>, vector<1x48x192xbf16>
    %55 = vector.shape_cast %54 : vector<1x48x192xbf16> to vector<48x192xbf16>
    %cst_22 = arith.constant dense<0.000000e+00> : vector<48x128xf32>
    %56 = tpu.matmul %55, %53, %cst_22 {dimension_numbers = #tpu.dot_dimension_numbers<[1], [0], [0], [1], [0, 0, 1, 1], [], []>} : vector<48x192xbf16>, vector<192x128xbf16>, vector<48x128xf32> -> vector<48x128xf32>
    %57 = arith.addf %48, %56 : vector<48x128xf32>
    %c122_i32 = arith.constant 122 : i32
    %58 = tpu.dynamic_rotate %2 by %c122_i32 dim 1 : vector<192x128xf32>, i32 -> vector<192x128xf32>
    %59 = vector.extract_strided_slice %3 {offsets = [6, 0], sizes = [1, 128], strides = [1, 1]} : vector<9x128xf32> to vector<1x128xf32>
    %60 = vector.broadcast %59 : vector<1x128xf32> to vector<192x128xf32>
    %61 = arith.mulf %58, %60 : vector<192x128xf32>
    %62 = arith.truncf %61 : vector<192x128xf32> to vector<192x128xbf16>
    %c6 = arith.constant 6 : index
    %c0_23 = arith.constant 0 : index
    %c0_24 = arith.constant 0 : index
    %63 = vector.load %arg1[%c6, %c0_23, %c0_24] : memref<9x48x192xbf16, #tpu.memory_space<vmem>>, vector<1x48x192xbf16>
    %64 = vector.shape_cast %63 : vector<1x48x192xbf16> to vector<48x192xbf16>
    %cst_25 = arith.constant dense<0.000000e+00> : vector<48x128xf32>
    %65 = tpu.matmul %64, %62, %cst_25 {dimension_numbers = #tpu.dot_dimension_numbers<[1], [0], [0], [1], [0, 0, 1, 1], [], []>} : vector<48x192xbf16>, vector<192x128xbf16>, vector<48x128xf32> -> vector<48x128xf32>
    %66 = arith.addf %57, %65 : vector<48x128xf32>
    %c121_i32 = arith.constant 121 : i32
    %67 = tpu.dynamic_rotate %2 by %c121_i32 dim 1 : vector<192x128xf32>, i32 -> vector<192x128xf32>
    %68 = vector.extract_strided_slice %3 {offsets = [7, 0], sizes = [1, 128], strides = [1, 1]} : vector<9x128xf32> to vector<1x128xf32>
    %69 = vector.broadcast %68 : vector<1x128xf32> to vector<192x128xf32>
    %70 = arith.mulf %67, %69 : vector<192x128xf32>
    %71 = arith.truncf %70 : vector<192x128xf32> to vector<192x128xbf16>
    %c7 = arith.constant 7 : index
    %c0_26 = arith.constant 0 : index
    %c0_27 = arith.constant 0 : index
    %72 = vector.load %arg1[%c7, %c0_26, %c0_27] : memref<9x48x192xbf16, #tpu.memory_space<vmem>>, vector<1x48x192xbf16>
    %73 = vector.shape_cast %72 : vector<1x48x192xbf16> to vector<48x192xbf16>
    %cst_28 = arith.constant dense<0.000000e+00> : vector<48x128xf32>
    %74 = tpu.matmul %73, %71, %cst_28 {dimension_numbers = #tpu.dot_dimension_numbers<[1], [0], [0], [1], [0, 0, 1, 1], [], []>} : vector<48x192xbf16>, vector<192x128xbf16>, vector<48x128xf32> -> vector<48x128xf32>
    %75 = arith.addf %66, %74 : vector<48x128xf32>
    %c120_i32 = arith.constant 120 : i32
    %76 = tpu.dynamic_rotate %2 by %c120_i32 dim 1 : vector<192x128xf32>, i32 -> vector<192x128xf32>
    %77 = vector.extract_strided_slice %3 {offsets = [8, 0], sizes = [1, 128], strides = [1, 1]} : vector<9x128xf32> to vector<1x128xf32>
    %78 = vector.broadcast %77 : vector<1x128xf32> to vector<192x128xf32>
    %79 = arith.mulf %76, %78 : vector<192x128xf32>
    %80 = arith.truncf %79 : vector<192x128xf32> to vector<192x128xbf16>
    %c8 = arith.constant 8 : index
    %c0_29 = arith.constant 0 : index
    %c0_30 = arith.constant 0 : index
    %81 = vector.load %arg1[%c8, %c0_29, %c0_30] : memref<9x48x192xbf16, #tpu.memory_space<vmem>>, vector<1x48x192xbf16>
    %82 = vector.shape_cast %81 : vector<1x48x192xbf16> to vector<48x192xbf16>
    %cst_31 = arith.constant dense<0.000000e+00> : vector<48x128xf32>
    %83 = tpu.matmul %82, %80, %cst_31 {dimension_numbers = #tpu.dot_dimension_numbers<[1], [0], [0], [1], [0, 0, 1, 1], [], []>} : vector<48x192xbf16>, vector<192x128xbf16>, vector<48x128xf32> -> vector<48x128xf32>
    %84 = arith.addf %75, %83 : vector<48x128xf32>
    %c0_32 = arith.constant 0 : index
    %c0_33 = arith.constant 0 : index
    %85 = vector.load %arg3[%c0_32, %c0_33] : memref<48x128xf32, #tpu.memory_space<vmem>>, vector<48x128xf32>
    tpu.vector_store %arg3[%c0_32, %c0_33], %84 {strides = array<i32>} : memref<48x128xf32, #tpu.memory_space<vmem>>, vector<48x128xf32>,
    return
  }
}

</mosaic_0001>

<llo_original>
// kernel: conv2d_forward.1
$region0: #{conv2d_forward.1}
  #allocation0 [shape = 'u32[]', space=smem, size = 0x4, offset = 0x4, fixed_abs, tag = 'smem constant byte address 0x4 - core index']
  #allocation1 [shape = 'u32[72,128]{1,0:T(1,128)}', space=vmem, size = 0x9000, scoped, tag = 'internal scratch']
  %s0 = inlined_call_operand.vmem [shape: f32[192,49], index: 0, kind: input, shape index: {}]
  %s1 = inlined_call_operand.vmem [shape: bf16[9,48,192], index: 1, kind: input, shape index: {}]
  %s2 = inlined_call_operand.vmem [shape: f32[9,128], index: 2, kind: input, shape index: {}]
  %s3 = inlined_call_operand.vmem [shape: f32[48,128], index: 3, kind: output, shape index: {}]
  %s4 = sld [smem:[#allocation0]]
  $region22: #{conv2d_forward.1} parent=0
    _
  %s6 = ssub.s32 1, %s4
  %s7 = scalar_select 0, %s6, %s4
  // Predicated region
  $region2: #{conv2d_forward.1} parent=0 // pred_check
    _
  $region3: #{conv2d_forward.1} parent=0 // pred_check_branch
    %9 = sbr.rel (0) target = $region5
  $region4: #{conv2d_forward.1} parent=0 // pred_region
    _
  $region5: #{conv2d_forward.1} parent=0 // pred_fallthru
    _
  // Predicated region
  $region6: #{conv2d_forward.1} parent=0 // pred_check
    _
  $region7: #{conv2d_forward.1} parent=0 // pred_check_branch
    %11 = sbr.rel (0) target = $region9
  $region8: #{conv2d_forward.1} parent=0 // pred_region
    _
  $region9: #{conv2d_forward.1} parent=0 // pred_fallthru
    _
  // Predicated region
  $region10: #{conv2d_forward.1} parent=0 // pred_check
    _
  $region11: #{conv2d_forward.1} parent=0 // pred_check_branch
    %13 = sbr.rel (0) target = $region13
  $region12: #{conv2d_forward.1} parent=0 // pred_region
    _
  $region13: #{conv2d_forward.1} parent=0 // pred_fallthru
    _
  %v15 = vld [vmem:[%s0] sm:$0xff]
  %v16 = vld [vmem:[%s0 + $0x8] sm:$0xff]
  %v17 = vld [vmem:[%s0 + $0x10] sm:$0xff]
  %v18 = vld [vmem:[%s0 + $0x18] sm:$0xff]
  %v19 = vld [vmem:[%s0 + $0x20] sm:$0xff]
  %v20 = vld [vmem:[%s0 + $0x28] sm:$0xff]
  %v21 = vld [vmem:[%s0 + $0x30] sm:$0xff]
  %v22 = vld [vmem:[%s0 + $0x38] sm:$0xff]
  %v23 = vld [vmem:[%s0 + $0x40] sm:$0xff]
  %v24 = vld [vmem:[%s0 + $0x48] sm:$0xff]
  %v25 = vld [vmem:[%s0 + $0x50] sm:$0xff]
  %v26 = vld [vmem:[%s0 + $0x58] sm:$0xff]
  %v27 = vld [vmem:[%s0 + $0x60] sm:$0xff]
  %v28 = vld [vmem:[%s0 + $0x68] sm:$0xff]
  %v29 = vld [vmem:[%s0 + $0x70] sm:$0xff]
  %v30 = vld [vmem:[%s0 + $0x78] sm:$0xff]
  %v31 = vld [vmem:[%s0 + $0x80] sm:$0xff]
  %v32 = vld [vmem:[%s0 + $0x88] sm:$0xff]
  %v33 = vld [vmem:[%s0 + $0x90] sm:$0xff]
  %v34 = vld [vmem:[%s0 + $0x98] sm:$0xff]
  %v35 = vld [vmem:[%s0 + $0xa0] sm:$0xff]
  %v36 = vld [vmem:[%s0 + $0xa8] sm:$0xff]
  %v37 = vld [vmem:[%s0 + $0xb0] sm:$0xff]
  %v38 = vld [vmem:[%s0 + $0xb8] sm:$0xff]
  %vm39 = vcmask 400384
  %v40 = vsel %vm39, %v15, 0.0
  %v41 = vsel %vm39, %v16, 0.0
  %v42 = vsel %vm39, %v17, 0.0
  %v43 = vsel %vm39, %v18, 0.0
  %v44 = vsel %vm39, %v19, 0.0
  %v45 = vsel %vm39, %v20, 0.0
  %v46 = vsel %vm39, %v21, 0.0
  %v47 = vsel %vm39, %v22, 0.0
  %v48 = vsel %vm39, %v23, 0.0
  %v49 = vsel %vm39, %v24, 0.0
  %v50 = vsel %vm39, %v25, 0.0
  %v51 = vsel %vm39, %v26, 0.0
  %v52 = vsel %vm39, %v27, 0.0
  %v53 = vsel %vm39, %v28, 0.0
  %v54 = vsel %vm39, %v29, 0.0
  %v55 = vsel %vm39, %v30, 0.0
  %v56 = vsel %vm39, %v31, 0.0
  %v57 = vsel %vm39, %v32, 0.0
  %v58 = vsel %vm39, %v33, 0.0
  %v59 = vsel %vm39, %v34, 0.0
  %v60 = vsel %vm39, %v35, 0.0
  %v61 = vsel %vm39, %v36, 0.0
  %v62 = vsel %vm39, %v37, 0.0
  %v63 = vsel %vm39, %v38, 0.0
  %v64 = vld [vmem:[%s2] sm:$0xff]
  %v65 = vld [vmem:[%s2 + $0x8] sm:$0x1]
  %66 = vrot.lane.b32.xlu0 %v40, 8
  %v67 = vpop.permute.xlu0 %66
  %68 = vrot.lane.b32.xlu0 %v41, 8
  %v69 = vpop.permute.xlu0 %68
  %70 = vrot.lane.b32.xlu0 %v42, 8
  %v71 = vpop.permute.xlu0 %70
  %72 = vrot.lane.b32.xlu0 %v43, 8
  %v73 = vpop.permute.xlu0 %72
  %74 = vrot.lane.b32.xlu0 %v44, 8
  %v75 = vpop.permute.xlu0 %74
  %76 = vrot.lane.b32.xlu0 %v45, 8
  %v77 = vpop.permute.xlu0 %76
  %78 = vrot.lane.b32.xlu0 %v46, 8
  %v79 = vpop.permute.xlu0 %78
  %80 = vrot.lane.b32.xlu0 %v47, 8
  %v81 = vpop.permute.xlu0 %80
  %82 = vrot.lane.b32.xlu0 %v48, 8
  %v83 = vpop.permute.xlu0 %82
  %84 = vrot.lane.b32.xlu0 %v49, 8
  %v85 = vpop.permute.xlu0 %84
  %86 = vrot.lane.b32.xlu0 %v50, 8
  %v87 = vpop.permute.xlu0 %86
  %88 = vrot.lane.b32.xlu0 %v51, 8
  %v89 = vpop.permute.xlu0 %88
  %90 = vrot.lane.b32.xlu0 %v52, 8
  %v91 = vpop.permute.xlu0 %90
  %92 = vrot.lane.b32.xlu0 %v53, 8
  %v93 = vpop.permute.xlu0 %92
  %94 = vrot.lane.b32.xlu0 %v54, 8
  %v95 = vpop.permute.xlu0 %94
  %96 = vrot.lane.b32.xlu0 %v55, 8
  %v97 = vpop.permute.xlu0 %96
  %98 = vrot.lane.b32.xlu0 %v56, 8
  %v99 = vpop.permute.xlu0 %98
  %100 = vrot.lane.b32.xlu0 %v57, 8
  %v101 = vpop.permute.xlu0 %100
  %102 = vrot.lane.b32.xlu0 %v58, 8
  %v103 = vpop.permute.xlu0 %102
  %104 = vrot.lane.b32.xlu0 %v59, 8
  %v105 = vpop.permute.xlu0 %104
  %106 = vrot.lane.b32.xlu0 %v60, 8
  %v107 = vpop.permute.xlu0 %106
  %108 = vrot.lane.b32.xlu0 %v61, 8
  %v109 = vpop.permute.xlu0 %108
  %110 = vrot.lane.b32.xlu0 %v62, 8
  %v111 = vpop.permute.xlu0 %110
  %112 = vrot.lane.b32.xlu0 %v63, 8
  %v113 = vpop.permute.xlu0 %112
  %v114 = vperm.slane %v64, 0
  %v115 = vmul.f32 %v67, %v114
  %v116 = vmul.f32 %v69, %v114
  %v117 = vmul.f32 %v71, %v114
  %v118 = vmul.f32 %v73, %v114
  %v119 = vmul.f32 %v75, %v114
  %v120 = vmul.f32 %v77, %v114
  %v121 = vmul.f32 %v79, %v114
  %v122 = vmul.f32 %v81, %v114
  %v123 = vmul.f32 %v83, %v114
  %v124 = vmul.f32 %v85, %v114
  %v125 = vmul.f32 %v87, %v114
  %v126 = vmul.f32 %v89, %v114
  %v127 = vmul.f32 %v91, %v114
  %v128 = vmul.f32 %v93, %v114
  %v129 = vmul.f32 %v95, %v114
  %v130 = vmul.f32 %v97, %v114
  %v131 = vmul.f32 %v99, %v114
  %v132 = vmul.f32 %v101, %v114
  %v133 = vmul.f32 %v103, %v114
  %v134 = vmul.f32 %v105, %v114
  %v135 = vmul.f32 %v107, %v114
  %v136 = vmul.f32 %v109, %v114
  %v137 = vmul.f32 %v111, %v114
  %v138 = vmul.f32 %v113, %v114
  %v139 = vpack.c.bf16 %v116, %v115
  %v140 = vpack.c.bf16 %v118, %v117
  %v141 = vpack.c.bf16 %v120, %v119
  %v142 = vpack.c.bf16 %v122, %v121
  %v143 = vpack.c.bf16 %v124, %v123
  %v144 = vpack.c.bf16 %v126, %v125
  %v145 = vpack.c.bf16 %v128, %v127
  %v146 = vpack.c.bf16 %v130, %v129
  %v147 = vpack.c.bf16 %v132, %v131
  %v148 = vpack.c.bf16 %v134, %v133
  %v149 = vpack.c.bf16 %v136, %v135
  %v150 = vpack.c.bf16 %v138, %v137
  %v151 = vld [vmem:[%s1] sm:$0xff]
  %v152 = vld [vmem:[%s1 + $0x8] sm:$0xff]
  %v153 = vld [vmem:[%s1 + $0x10] sm:$0xff]
  %v154 = vld [vmem:[%s1 + $0x18] sm:$0xff]
  %v155 = vld [vmem:[%s1 + $0x20] sm:$0xff]
  %v156 = vld [vmem:[%s1 + $0x28] sm:$0xff]
  %157 = vrot.lane.b32.xlu0 %v40, 7
  %v158 = vpop.permute.xlu0 %157
  %159 = vrot.lane.b32.xlu0 %v41, 7
  %v160 = vpop.permute.xlu0 %159
  %161 = vrot.lane.b32.xlu0 %v42, 7
  %v162 = vpop.permute.xlu0 %161
  %163 = vrot.lane.b32.xlu0 %v43, 7
  %v164 = vpop.permute.xlu0 %163
  %165 = vrot.lane.b32.xlu0 %v44, 7
  %v166 = vpop.permute.xlu0 %165
  %167 = vrot.lane.b32.xlu0 %v45, 7
  %v168 = vpop.permute.xlu0 %167
  %169 = vrot.lane.b32.xlu0 %v46, 7
  %v170 = vpop.permute.xlu0 %169
  %171 = vrot.lane.b32.xlu0 %v47, 7
  %v172 = vpop.permute.xlu0 %171
  %173 = vrot.lane.b32.xlu0 %v48, 7
  %v174 = vpop.permute.xlu0 %173
  %175 = vrot.lane.b32.xlu0 %v49, 7
  %v176 = vpop.permute.xlu0 %175
  %177 = vrot.lane.b32.xlu0 %v50, 7
  %v178 = vpop.permute.xlu0 %177
  %179 = vrot.lane.b32.xlu0 %v51, 7
  %v180 = vpop.permute.xlu0 %179
  %181 = vrot.lane.b32.xlu0 %v52, 7
  %v182 = vpop.permute.xlu0 %181
  %183 = vrot.lane.b32.xlu0 %v53, 7
  %v184 = vpop.permute.xlu0 %183
  %185 = vrot.lane.b32.xlu0 %v54, 7
  %v186 = vpop.permute.xlu0 %185
  %187 = vrot.lane.b32.xlu0 %v55, 7
  %v188 = vpop.permute.xlu0 %187
  %189 = vrot.lane.b32.xlu0 %v56, 7
  %v190 = vpop.permute.xlu0 %189
  %191 = vrot.lane.b32.xlu0 %v57, 7
  %v192 = vpop.permute.xlu0 %191
  %193 = vrot.lane.b32.xlu0 %v58, 7
  %v194 = vpop.permute.xlu0 %193
  %195 = vrot.lane.b32.xlu0 %v59, 7
  %v196 = vpop.permute.xlu0 %195
  %197 = vrot.lane.b32.xlu0 %v60, 7
  %v198 = vpop.permute.xlu0 %197
  %199 = vrot.lane.b32.xlu0 %v61, 7
  %v200 = vpop.permute.xlu0 %199
  %201 = vrot.lane.b32.xlu0 %v62, 7
  %v202 = vpop.permute.xlu0 %201
  %203 = vrot.lane.b32.xlu0 %v63, 7
  %v204 = vpop.permute.xlu0 %203
  %v205 = vperm.slane %v64, 1
  %v206 = vmul.f32 %v158, %v205
  %v207 = vmul.f32 %v160, %v205
  %v208 = vmul.f32 %v162, %v205
  %v209 = vmul.f32 %v164, %v205
  %v210 = vmul.f32 %v166, %v205
  %v211 = vmul.f32 %v168, %v205
  %v212 = vmul.f32 %v170, %v205
  %v213 = vmul.f32 %v172, %v205
  %v214 = vmul.f32 %v174, %v205
  %v215 = vmul.f32 %v176, %v205
  %v216 = vmul.f32 %v178, %v205
  %v217 = vmul.f32 %v180, %v205
  %v218 = vmul.f32 %v182, %v205
  %v219 = vmul.f32 %v184, %v205
  %v220 = vmul.f32 %v186, %v205
  %v221 = vmul.f32 %v188, %v205
  %v222 = vmul.f32 %v190, %v205
  %v223 = vmul.f32 %v192, %v205
  %v224 = vmul.f32 %v194, %v205
  %v225 = vmul.f32 %v196, %v205
  %v226 = vmul.f32 %v198, %v205
  %v227 = vmul.f32 %v200, %v205
  %v228 = vmul.f32 %v202, %v205
  %v229 = vmul.f32 %v204, %v205
  %v230 = vpack.c.bf16 %v207, %v206
  %v231 = vpack.c.bf16 %v209, %v208
  %v232 = vpack.c.bf16 %v211, %v210
  %v233 = vpack.c.bf16 %v213, %v212
  %v234 = vpack.c.bf16 %v215, %v214
  %v235 = vpack.c.bf16 %v217, %v216
  %v236 = vpack.c.bf16 %v219, %v218
  %v237 = vpack.c.bf16 %v221, %v220
  %v238 = vpack.c.bf16 %v223, %v222
  %v239 = vpack.c.bf16 %v225, %v224
  %v240 = vpack.c.bf16 %v227, %v226
  %v241 = vpack.c.bf16 %v229, %v228
  %s242 = scalar_lea.vmem %s1, 48
  %v243 = vld [vmem:[%s242] sm:$0xff]
  %v244 = vld [vmem:[%s242 + $0x8] sm:$0xff]
  %v245 = vld [vmem:[%s242 + $0x10] sm:$0xff]
  %v246 = vld [vmem:[%s242 + $0x18] sm:$0xff]
  %v247 = vld [vmem:[%s242 + $0x20] sm:$0xff]
  %v248 = vld [vmem:[%s242 + $0x28] sm:$0xff]
  %v255 = vunpack.c.l.b16 %v243
  %v256 = vunpack.c.h.b16 %v243
  %v257 = vunpack.c.l.b16 %v244
  %v258 = vunpack.c.h.b16 %v244
  %v259 = vunpack.c.l.b16 %v245
  %v260 = vunpack.c.h.b16 %v245
  %v261 = vunpack.c.l.b16 %v246
  %v262 = vunpack.c.h.b16 %v246
  %v263 = vunpack.c.l.b16 %v247
  %v264 = vunpack.c.h.b16 %v247
  %v265 = vunpack.c.l.b16 %v248
  %v266 = vunpack.c.h.b16 %v248
  %v267 = vpack.c.b16 %v257, %v255
  %v268 = vpack.c.b16 %v258, %v256
  %v269 = vpack.c.b16 %v261, %v259
  %v270 = vpack.c.b16 %v262, %v260
  %v271 = vpack.c.b16 %v265, %v263
  %v272 = vpack.c.b16 %v266, %v264
  %vm276 = vcmask 523264
  %v278 = vsel %vm276, %v268, 0
  %v281 = vsel %vm276, %v270, 0
  %v284 = vsel %vm276, %v272, 0
  %286 = vmatpush.bf16.msra.mxu0 %v237
  %287 = vmatpush.bf16.msra.mxu0 %v236
  %288 = vmatpush.bf16.msra.mxu0 %v235
  %289 = vmatpush.bf16.msra.mxu0 %v234
  %290 = vmatpush.bf16.msra.mxu0 %v233
  %291 = vmatpush.bf16.msra.mxu0 %v232
  %292 = vmatpush.bf16.msra.mxu0 %v231
  %293 = vmatpush.bf16.msra.mxu0 %v230
  %294 = vmatmul.bf16.gmra.mxu0 %v267
  %v295 = vpop.f32.mrf.mxu0
  %v296 = vadd.f32 0.0, %v295
  %v297 = vpop.f32.mrf.mxu0
  %v298 = vadd.f32 0.0, %v297
  %299 = vmatmul.bf16.gmra.mxu0 %v269
  %v300 = vpop.f32.mrf.mxu0
  %v301 = vadd.f32 0.0, %v300
  %v302 = vpop.f32.mrf.mxu0
  %v303 = vadd.f32 0.0, %v302
  %304 = vmatmul.bf16.gmra.mxu0 %v271
  %v305 = vpop.f32.mrf.mxu0
  %v306 = vadd.f32 0.0, %v305
  %v307 = vpop.f32.mrf.mxu0
  %v308 = vadd.f32 0.0, %v307
  %309 = vdwg.mxu0
  %310 = vmatpush.bf16.msra.mxu0 0
  %311 = vmatpush.bf16.msra.mxu0 0
  %312 = vmatpush.bf16.msra.mxu0 0
  %313 = vmatpush.bf16.msra.mxu0 0
  %314 = vmatpush.bf16.msra.mxu0 %v241
  %315 = vmatpush.bf16.msra.mxu0 %v240
  %316 = vmatpush.bf16.msra.mxu0 %v239
  %317 = vmatpush.bf16.msra.mxu0 %v238
  %318 = vmatmul.bf16.gmra.mxu0 %v278
  %v319 = vpop.f32.mrf.mxu0
  %v320 = vadd.f32 %v296, %v319
  %v321 = vpop.f32.mrf.mxu0
  %v322 = vadd.f32 %v298, %v321
  %323 = vmatmul.bf16.gmra.mxu0 %v281
  %v324 = vpop.f32.mrf.mxu0
  %v325 = vadd.f32 %v301, %v324
  %v326 = vpop.f32.mrf.mxu0
  %v327 = vadd.f32 %v303, %v326
  %328 = vmatmul.bf16.gmra.mxu0 %v284
  %v329 = vpop.f32.mrf.mxu0
  %v330 = vadd.f32 %v306, %v329
  %v331 = vpop.f32.mrf.mxu0
  %v332 = vadd.f32 %v308, %v331
  %333 = vdwg.mxu0
  %v340 = vunpack.c.l.b16 %v151
  %v341 = vunpack.c.h.b16 %v151
  %v342 = vunpack.c.l.b16 %v152
  %v343 = vunpack.c.h.b16 %v152
  %v344 = vunpack.c.l.b16 %v153
  %v345 = vunpack.c.h.b16 %v153
  %v346 = vunpack.c.l.b16 %v154
  %v347 = vunpack.c.h.b16 %v154
  %v348 = vunpack.c.l.b16 %v155
  %v349 = vunpack.c.h.b16 %v155
  %v350 = vunpack.c.l.b16 %v156
  %v351 = vunpack.c.h.b16 %v156
  %v352 = vpack.c.b16 %v342, %v340
  %v353 = vpack.c.b16 %v343, %v341
  %v354 = vpack.c.b16 %v346, %v344
  %v355 = vpack.c.b16 %v347, %v345
  %v356 = vpack.c.b16 %v350, %v348
  %v357 = vpack.c.b16 %v351, %v349
  %v362 = vsel %vm276, %v353, 0
  %v365 = vsel %vm276, %v355, 0
  %v368 = vsel %vm276, %v357, 0
  %370 = vmatpush.bf16.msra.mxu0 %v146
  %371 = vmatpush.bf16.msra.mxu0 %v145
  %372 = vmatpush.bf16.msra.mxu0 %v144
  %373 = vmatpush.bf16.msra.mxu0 %v143
  %374 = vmatpush.bf16.msra.mxu0 %v142
  %375 = vmatpush.bf16.msra.mxu0 %v141
  %376 = vmatpush.bf16.msra.mxu0 %v140
  %377 = vmatpush.bf16.msra.mxu0 %v139
  %378 = vmatmul.bf16.gmra.mxu0 %v352
  %v379 = vpop.f32.mrf.mxu0
  %v380 = vadd.f32 %v320, %v379
  %v381 = vpop.f32.mrf.mxu0
  %v382 = vadd.f32 %v322, %v381
  %383 = vmatmul.bf16.gmra.mxu0 %v354
  %v384 = vpop.f32.mrf.mxu0
  %v385 = vadd.f32 %v325, %v384
  %v386 = vpop.f32.mrf.mxu0
  %v387 = vadd.f32 %v327, %v386
  %388 = vmatmul.bf16.gmra.mxu0 %v356
  %v389 = vpop.f32.mrf.mxu0
  %v390 = vadd.f32 %v330, %v389
  %v391 = vpop.f32.mrf.mxu0
  %v392 = vadd.f32 %v332, %v391
  %393 = vdwg.mxu0
  %394 = vmatpush.bf16.msra.mxu0 0
  %395 = vmatpush.bf16.msra.mxu0 0
  %396 = vmatpush.bf16.msra.mxu0 0
  %397 = vmatpush.bf16.msra.mxu0 0
  %398 = vmatpush.bf16.msra.mxu0 %v150
  %399 = vmatpush.bf16.msra.mxu0 %v149
  %400 = vmatpush.bf16.msra.mxu0 %v148
  %401 = vmatpush.bf16.msra.mxu0 %v147
  %402 = vmatmul.bf16.gmra.mxu0 %v362
  %v403 = vpop.f32.mrf.mxu0
  %v404 = vadd.f32 %v380, %v403
  %v405 = vpop.f32.mrf.mxu0
  %v406 = vadd.f32 %v382, %v405
  %407 = vmatmul.bf16.gmra.mxu0 %v365
  %v408 = vpop.f32.mrf.mxu0
  %v409 = vadd.f32 %v385, %v408
  %v410 = vpop.f32.mrf.mxu0
  %v411 = vadd.f32 %v387, %v410
  %412 = vmatmul.bf16.gmra.mxu0 %v368
  %v413 = vpop.f32.mrf.mxu0
  %v414 = vadd.f32 %v390, %v413
  %v415 = vpop.f32.mrf.mxu0
  %v416 = vadd.f32 %v392, %v415
  %417 = vdwg.mxu0
  %418 = vrot.lane.b32.xlu0 %v40, 6
  %v419 = vpop.permute.xlu0 %418
  %420 = vrot.lane.b32.xlu0 %v41, 6
  %v421 = vpop.permute.xlu0 %420
  %422 = vrot.lane.b32.xlu0 %v42, 6
  %v423 = vpop.permute.xlu0 %422
  %424 = vrot.lane.b32.xlu0 %v43, 6
  %v425 = vpop.permute.xlu0 %424
  %426 = vrot.lane.b32.xlu0 %v44, 6
  %v427 = vpop.permute.xlu0 %426
  %428 = vrot.lane.b32.xlu0 %v45, 6
  %v429 = vpop.permute.xlu0 %428
  %430 = vrot.lane.b32.xlu0 %v46, 6
  %v431 = vpop.permute.xlu0 %430
  %432 = vrot.lane.b32.xlu0 %v47, 6
  %v433 = vpop.permute.xlu0 %432
  %434 = vrot.lane.b32.xlu0 %v48, 6
  %v435 = vpop.permute.xlu0 %434
  %436 = vrot.lane.b32.xlu0 %v49, 6
  %v437 = vpop.permute.xlu0 %436
  %438 = vrot.lane.b32.xlu0 %v50, 6
  %v439 = vpop.permute.xlu0 %438
  %440 = vrot.lane.b32.xlu0 %v51, 6
  %v441 = vpop.permute.xlu0 %440
  %442 = vrot.lane.b32.xlu0 %v52, 6
  %v443 = vpop.permute.xlu0 %442
  %444 = vrot.lane.b32.xlu0 %v53, 6
  %v445 = vpop.permute.xlu0 %444
  %446 = vrot.lane.b32.xlu0 %v54, 6
  %v447 = vpop.permute.xlu0 %446
  %448 = vrot.lane.b32.xlu0 %v55, 6
  %v449 = vpop.permute.xlu0 %448
  %450 = vrot.lane.b32.xlu0 %v56, 6
  %v451 = vpop.permute.xlu0 %450
  %452 = vrot.lane.b32.xlu0 %v57, 6
  %v453 = vpop.permute.xlu0 %452
  %454 = vrot.lane.b32.xlu0 %v58, 6
  %v455 = vpop.permute.xlu0 %454
  %456 = vrot.lane.b32.xlu0 %v59, 6
  %v457 = vpop.permute.xlu0 %456
  %458 = vrot.lane.b32.xlu0 %v60, 6
  %v459 = vpop.permute.xlu0 %458
  %460 = vrot.lane.b32.xlu0 %v61, 6
  %v461 = vpop.permute.xlu0 %460
  %462 = vrot.lane.b32.xlu0 %v62, 6
  %v463 = vpop.permute.xlu0 %462
  %464 = vrot.lane.b32.xlu0 %v63, 6
  %v465 = vpop.permute.xlu0 %464
  %v466 = vperm.slane %v64, 2
  %v467 = vmul.f32 %v419, %v466
  %v468 = vmul.f32 %v421, %v466
  %v469 = vmul.f32 %v423, %v466
  %v470 = vmul.f32 %v425, %v466
  %v471 = vmul.f32 %v427, %v466
  %v472 = vmul.f32 %v429, %v466
  %v473 = vmul.f32 %v431, %v466
  %v474 = vmul.f32 %v433, %v466
  %v475 = vmul.f32 %v435, %v466
  %v476 = vmul.f32 %v437, %v466
  %v477 = vmul.f32 %v439, %v466
  %v478 = vmul.f32 %v441, %v466
  %v479 = vmul.f32 %v443, %v466
  %v480 = vmul.f32 %v445, %v466
  %v481 = vmul.f32 %v447, %v466
  %v482 = vmul.f32 %v449, %v466
  %v483 = vmul.f32 %v451, %v466
  %v484 = vmul.f32 %v453, %v466
  %v485 = vmul.f32 %v455, %v466
  %v486 = vmul.f32 %v457, %v466
  %v487 = vmul.f32 %v459, %v466
  %v488 = vmul.f32 %v461, %v466
  %v489 = vmul.f32 %v463, %v466
  %v490 = vmul.f32 %v465, %v466
  %v491 = vpack.c.bf16 %v468, %v467
  %v492 = vpack.c.bf16 %v470, %v469
  %v493 = vpack.c.bf16 %v472, %v471
  %v494 = vpack.c.bf16 %v474, %v473
  %v495 = vpack.c.bf16 %v476, %v475
  %v496 = vpack.c.bf16 %v478, %v477
  %v497 = vpack.c.bf16 %v480, %v479
  %v498 = vpack.c.bf16 %v482, %v481
  %v499 = vpack.c.bf16 %v484, %v483
  %v500 = vpack.c.bf16 %v486, %v485
  %v501 = vpack.c.bf16 %v488, %v487
  %v502 = vpack.c.bf16 %v490, %v489
  %s503 = scalar_lea.vmem %s1, 96
  %v504 = vld [vmem:[%s503] sm:$0xff]
  %v505 = vld [vmem:[%s503 + $0x8] sm:$0xff]
  %v506 = vld [vmem:[%s503 + $0x10] sm:$0xff]
  %v507 = vld [vmem:[%s503 + $0x18] sm:$0xff]
  %v508 = vld [vmem:[%s503 + $0x20] sm:$0xff]
  %v509 = vld [vmem:[%s503 + $0x28] sm:$0xff]
  %v516 = vunpack.c.l.b16 %v504
  %v517 = vunpack.c.h.b16 %v504
  %v518 = vunpack.c.l.b16 %v505
  %v519 = vunpack.c.h.b16 %v505
  %v520 = vunpack.c.l.b16 %v506
  %v521 = vunpack.c.h.b16 %v506
  %v522 = vunpack.c.l.b16 %v507
  %v523 = vunpack.c.h.b16 %v507
  %v524 = vunpack.c.l.b16 %v508
  %v525 = vunpack.c.h.b16 %v508
  %v526 = vunpack.c.l.b16 %v509
  %v527 = vunpack.c.h.b16 %v509
  %v528 = vpack.c.b16 %v518, %v516
  %v529 = vpack.c.b16 %v519, %v517
  %v530 = vpack.c.b16 %v522, %v520
  %v531 = vpack.c.b16 %v523, %v521
  %v532 = vpack.c.b16 %v526, %v524
  %v533 = vpack.c.b16 %v527, %v525
  %v538 = vsel %vm276, %v529, 0
  %v541 = vsel %vm276, %v531, 0
  %v544 = vsel %vm276, %v533, 0
  %546 = vmatpush.bf16.msra.mxu0 %v498
  %547 = vmatpush.bf16.msra.mxu0 %v497
  %548 = vmatpush.bf16.msra.mxu0 %v496
  %549 = vmatpush.bf16.msra.mxu0 %v495
  %550 = vmatpush.bf16.msra.mxu0 %v494
  %551 = vmatpush.bf16.msra.mxu0 %v493
  %552 = vmatpush.bf16.msra.mxu0 %v492
  %553 = vmatpush.bf16.msra.mxu0 %v491
  %554 = vmatmul.bf16.gmra.mxu0 %v528
  %v555 = vpop.f32.mrf.mxu0
  %v556 = vadd.f32 0.0, %v555
  %v557 = vpop.f32.mrf.mxu0
  %v558 = vadd.f32 0.0, %v557
  %559 = vmatmul.bf16.gmra.mxu0 %v530
  %v560 = vpop.f32.mrf.mxu0
  %v561 = vadd.f32 0.0, %v560
  %v562 = vpop.f32.mrf.mxu0
  %v563 = vadd.f32 0.0, %v562
  %564 = vmatmul.bf16.gmra.mxu0 %v532
  %v565 = vpop.f32.mrf.mxu0
  %v566 = vadd.f32 0.0, %v565
  %v567 = vpop.f32.mrf.mxu0
  %v568 = vadd.f32 0.0, %v567
  %569 = vdwg.mxu0
  %570 = vmatpush.bf16.msra.mxu0 0
  %571 = vmatpush.bf16.msra.mxu0 0
  %572 = vmatpush.bf16.msra.mxu0 0
  %573 = vmatpush.bf16.msra.mxu0 0
  %574 = vmatpush.bf16.msra.mxu0 %v502
  %575 = vmatpush.bf16.msra.mxu0 %v501
  %576 = vmatpush.bf16.msra.mxu0 %v500
  %577 = vmatpush.bf16.msra.mxu0 %v499
  %578 = vmatmul.bf16.gmra.mxu0 %v538
  %v579 = vpop.f32.mrf.mxu0
  %v580 = vadd.f32 %v556, %v579
  %v581 = vpop.f32.mrf.mxu0
  %v582 = vadd.f32 %v558, %v581
  %583 = vmatmul.bf16.gmra.mxu0 %v541
  %v584 = vpop.f32.mrf.mxu0
  %v585 = vadd.f32 %v561, %v584
  %v586 = vpop.f32.mrf.mxu0
  %v587 = vadd.f32 %v563, %v586
  %588 = vmatmul.bf16.gmra.mxu0 %v544
  %v589 = vpop.f32.mrf.mxu0
  %v590 = vadd.f32 %v566, %v589
  %v591 = vpop.f32.mrf.mxu0
  %v592 = vadd.f32 %v568, %v591
  %593 = vdwg.mxu0
  %v594 = vadd.f32 %v404, %v580
  %v595 = vadd.f32 %v406, %v582
  %v596 = vadd.f32 %v409, %v585
  %v597 = vadd.f32 %v411, %v587
  %v598 = vadd.f32 %v414, %v590
  %v599 = vadd.f32 %v416, %v592
  %600 = vrot.lane.b32.xlu0 %v40, 1
  %v601 = vpop.permute.xlu0 %600
  %602 = vrot.lane.b32.xlu0 %v41, 1
  %v603 = vpop.permute.xlu0 %602
  %604 = vrot.lane.b32.xlu0 %v42, 1
  %v605 = vpop.permute.xlu0 %604
  %606 = vrot.lane.b32.xlu0 %v43, 1
  %v607 = vpop.permute.xlu0 %606
  %608 = vrot.lane.b32.xlu0 %v44, 1
  %v609 = vpop.permute.xlu0 %608
  %610 = vrot.lane.b32.xlu0 %v45, 1
  %v611 = vpop.permute.xlu0 %610
  %612 = vrot.lane.b32.xlu0 %v46, 1
  %v613 = vpop.permute.xlu0 %612
  %614 = vrot.lane.b32.xlu0 %v47, 1
  %v615 = vpop.permute.xlu0 %614
  %616 = vrot.lane.b32.xlu0 %v48, 1
  %v617 = vpop.permute.xlu0 %616
  %618 = vrot.lane.b32.xlu0 %v49, 1
  %v619 = vpop.permute.xlu0 %618
  %620 = vrot.lane.b32.xlu0 %v50, 1
  %v621 = vpop.permute.xlu0 %620
  %622 = vrot.lane.b32.xlu0 %v51, 1
  %v623 = vpop.permute.xlu0 %622
  %624 = vrot.lane.b32.xlu0 %v52, 1
  %v625 = vpop.permute.xlu0 %624
  %626 = vrot.lane.b32.xlu0 %v53, 1
  %v627 = vpop.permute.xlu0 %626
  %628 = vrot.lane.b32.xlu0 %v54, 1
  %v629 = vpop.permute.xlu0 %628
  %630 = vrot.lane.b32.xlu0 %v55, 1
  %v631 = vpop.permute.xlu0 %630
  %632 = vrot.lane.b32.xlu0 %v56, 1
  %v633 = vpop.permute.xlu0 %632
  %634 = vrot.lane.b32.xlu0 %v57, 1
  %v635 = vpop.permute.xlu0 %634
  %636 = vrot.lane.b32.xlu0 %v58, 1
  %v637 = vpop.permute.xlu0 %636
  %638 = vrot.lane.b32.xlu0 %v59, 1
  %v639 = vpop.permute.xlu0 %638
  %640 = vrot.lane.b32.xlu0 %v60, 1
  %v641 = vpop.permute.xlu0 %640
  %642 = vrot.lane.b32.xlu0 %v61, 1
  %v643 = vpop.permute.xlu0 %642
  %644 = vrot.lane.b32.xlu0 %v62, 1
  %v645 = vpop.permute.xlu0 %644
  %646 = vrot.lane.b32.xlu0 %v63, 1
  %v647 = vpop.permute.xlu0 %646
  %v648 = vperm.slane %v64, 3
  %v649 = vmul.f32 %v601, %v648
  %v650 = vmul.f32 %v603, %v648
  %v651 = vmul.f32 %v605, %v648
  %v652 = vmul.f32 %v607, %v648
  %v653 = vmul.f32 %v609, %v648
  %v654 = vmul.f32 %v611, %v648
  %v655 = vmul.f32 %v613, %v648
  %v656 = vmul.f32 %v615, %v648
  %v657 = vmul.f32 %v617, %v648
  %v658 = vmul.f32 %v619, %v648
  %v659 = vmul.f32 %v621, %v648
  %v660 = vmul.f32 %v623, %v648
  %v661 = vmul.f32 %v625, %v648
  %v662 = vmul.f32 %v627, %v648
  %v663 = vmul.f32 %v629, %v648
  %v664 = vmul.f32 %v631, %v648
  %v665 = vmul.f32 %v633, %v648
  %v666 = vmul.f32 %v635, %v648
  %v667 = vmul.f32 %v637, %v648
  %v668 = vmul.f32 %v639, %v648
  %v669 = vmul.f32 %v641, %v648
  %v670 = vmul.f32 %v643, %v648
  %v671 = vmul.f32 %v645, %v648
  %v672 = vmul.f32 %v647, %v648
  %v673 = vpack.c.bf16 %v650, %v649
  %v674 = vpack.c.bf16 %v652, %v651
  %v675 = vpack.c.bf16 %v654, %v653
  %v676 = vpack.c.bf16 %v656, %v655
  %v677 = vpack.c.bf16 %v658, %v657
  %v678 = vpack.c.bf16 %v660, %v659
  %v679 = vpack.c.bf16 %v662, %v661
  %v680 = vpack.c.bf16 %v664, %v663
  %v681 = vpack.c.bf16 %v666, %v665
  %v682 = vpack.c.bf16 %v668, %v667
  %v683 = vpack.c.bf16 %v670, %v669
  %v684 = vpack.c.bf16 %v672, %v671
  %s685 = scalar_lea.vmem %s1, 144
  %v686 = vld [vmem:[%s685] sm:$0xff]
  %v687 = vld [vmem:[%s685 + $0x8] sm:$0xff]
  %v688 = vld [vmem:[%s685 + $0x10] sm:$0xff]
  %v689 = vld [vmem:[%s685 + $0x18] sm:$0xff]
  %v690 = vld [vmem:[%s685 + $0x20] sm:$0xff]
  %v691 = vld [vmem:[%s685 + $0x28] sm:$0xff]
  %v698 = vunpack.c.l.b16 %v686
  %v699 = vunpack.c.h.b16 %v686
  %v700 = vunpack.c.l.b16 %v687
  %v701 = vunpack.c.h.b16 %v687
  %v702 = vunpack.c.l.b16 %v688
  %v703 = vunpack.c.h.b16 %v688
  %v704 = vunpack.c.l.b16 %v689
  %v705 = vunpack.c.h.b16 %v689
  %v706 = vunpack.c.l.b16 %v690
  %v707 = vunpack.c.h.b16 %v690
  %v708 = vunpack.c.l.b16 %v691
  %v709 = vunpack.c.h.b16 %v691
  %v710 = vpack.c.b16 %v700, %v698
  %v711 = vpack.c.b16 %v701, %v699
  %v712 = vpack.c.b16 %v704, %v702
  %v713 = vpack.c.b16 %v705, %v703
  %v714 = vpack.c.b16 %v708, %v706
  %v715 = vpack.c.b16 %v709, %v707
  %v720 = vsel %vm276, %v711, 0
  %v723 = vsel %vm276, %v713, 0
  %v726 = vsel %vm276, %v715, 0
  %728 = vmatpush.bf16.msra.mxu0 %v680
  %729 = vmatpush.bf16.msra.mxu0 %v679
  %730 = vmatpush.bf16.msra.mxu0 %v678
  %731 = vmatpush.bf16.msra.mxu0 %v677
  %732 = vmatpush.bf16.msra.mxu0 %v676
  %733 = vmatpush.bf16.msra.mxu0 %v675
  %734 = vmatpush.bf16.msra.mxu0 %v674
  %735 = vmatpush.bf16.msra.mxu0 %v673
  %736 = vmatmul.bf16.gmra.mxu0 %v710
  %v737 = vpop.f32.mrf.mxu0
  %v738 = vadd.f32 0.0, %v737
  %v739 = vpop.f32.mrf.mxu0
  %v740 = vadd.f32 0.0, %v739
  %741 = vmatmul.bf16.gmra.mxu0 %v712
  %v742 = vpop.f32.mrf.mxu0
  %v743 = vadd.f32 0.0, %v742
  %v744 = vpop.f32.mrf.mxu0
  %v745 = vadd.f32 0.0, %v744
  %746 = vmatmul.bf16.gmra.mxu0 %v714
  %v747 = vpop.f32.mrf.mxu0
  %v748 = vadd.f32 0.0, %v747
  %v749 = vpop.f32.mrf.mxu0
  %v750 = vadd.f32 0.0, %v749
  %751 = vdwg.mxu0
  %752 = vmatpush.bf16.msra.mxu0 0
  %753 = vmatpush.bf16.msra.mxu0 0
  %754 = vmatpush.bf16.msra.mxu0 0
  %755 = vmatpush.bf16.msra.mxu0 0
  %756 = vmatpush.bf16.msra.mxu0 %v684
  %757 = vmatpush.bf16.msra.mxu0 %v683
  %758 = vmatpush.bf16.msra.mxu0 %v682
  %759 = vmatpush.bf16.msra.mxu0 %v681
  %760 = vmatmul.bf16.gmra.mxu0 %v720
  %v761 = vpop.f32.mrf.mxu0
  %v762 = vadd.f32 %v738, %v761
  %v763 = vpop.f32.mrf.mxu0
  %v764 = vadd.f32 %v740, %v763
  %765 = vmatmul.bf16.gmra.mxu0 %v723
  %v766 = vpop.f32.mrf.mxu0
  %v767 = vadd.f32 %v743, %v766
  %v768 = vpop.f32.mrf.mxu0
  %v769 = vadd.f32 %v745, %v768
  %770 = vmatmul.bf16.gmra.mxu0 %v726
  %v771 = vpop.f32.mrf.mxu0
  %v772 = vadd.f32 %v748, %v771
  %v773 = vpop.f32.mrf.mxu0
  %v774 = vadd.f32 %v750, %v773
  %775 = vdwg.mxu0
  %v776 = vadd.f32 %v594, %v762
  %v777 = vadd.f32 %v595, %v764
  %v778 = vadd.f32 %v596, %v767
  %v779 = vadd.f32 %v597, %v769
  %v780 = vadd.f32 %v598, %v772
  %v781 = vadd.f32 %v599, %v774
  %v782 = vperm.slane %v64, 4
  %v783 = vmul.f32 %v40, %v782
  %v784 = vmul.f32 %v41, %v782
  %v785 = vmul.f32 %v42, %v782
  %v786 = vmul.f32 %v43, %v782
  %v787 = vmul.f32 %v44, %v782
  %v788 = vmul.f32 %v45, %v782
  %v789 = vmul.f32 %v46, %v782
  %v790 = vmul.f32 %v47, %v782
  %v791 = vmul.f32 %v48, %v782
  %v792 = vmul.f32 %v49, %v782
  %v793 = vmul.f32 %v50, %v782
  %v794 = vmul.f32 %v51, %v782
  %v795 = vmul.f32 %v52, %v782
  %v796 = vmul.f32 %v53, %v782
  %v797 = vmul.f32 %v54, %v782
  %v798 = vmul.f32 %v55, %v782
  %v799 = vmul.f32 %v56, %v782
  %v800 = vmul.f32 %v57, %v782
  %v801 = vmul.f32 %v58, %v782
  %v802 = vmul.f32 %v59, %v782
  %v803 = vmul.f32 %v60, %v782
  %v804 = vmul.f32 %v61, %v782
  %v805 = vmul.f32 %v62, %v782
  %v806 = vmul.f32 %v63, %v782
  %v807 = vpack.c.bf16 %v784, %v783
  %v808 = vpack.c.bf16 %v786, %v785
  %v809 = vpack.c.bf16 %v788, %v787
  %v810 = vpack.c.bf16 %v790, %v789
  %v811 = vpack.c.bf16 %v792, %v791
  %v812 = vpack.c.bf16 %v794, %v793
  %v813 = vpack.c.bf16 %v796, %v795
  %v814 = vpack.c.bf16 %v798, %v797
  %v815 = vpack.c.bf16 %v800, %v799
  %v816 = vpack.c.bf16 %v802, %v801
  %v817 = vpack.c.bf16 %v804, %v803
  %v818 = vpack.c.bf16 %v806, %v805
  %s819 = scalar_lea.vmem %s1, 192
  %v820 = vld [vmem:[%s819] sm:$0xff]
  %v821 = vld [vmem:[%s819 + $0x8] sm:$0xff]
  %v822 = vld [vmem:[%s819 + $0x10] sm:$0xff]
  %v823 = vld [vmem:[%s819 + $0x18] sm:$0xff]
  %v824 = vld [vmem:[%s819 + $0x20] sm:$0xff]
  %v825 = vld [vmem:[%s819 + $0x28] sm:$0xff]
  %v832 = vunpack.c.l.b16 %v820
  %v833 = vunpack.c.h.b16 %v820
  %v834 = vunpack.c.l.b16 %v821
  %v835 = vunpack.c.h.b16 %v821
  %v836 = vunpack.c.l.b16 %v822
  %v837 = vunpack.c.h.b16 %v822
  %v838 = vunpack.c.l.b16 %v823
  %v839 = vunpack.c.h.b16 %v823
  %v840 = vunpack.c.l.b16 %v824
  %v841 = vunpack.c.h.b16 %v824
  %v842 = vunpack.c.l.b16 %v825
  %v843 = vunpack.c.h.b16 %v825
  %v844 = vpack.c.b16 %v834, %v832
  %v845 = vpack.c.b16 %v835, %v833
  %v846 = vpack.c.b16 %v838, %v836
  %v847 = vpack.c.b16 %v839, %v837
  %v848 = vpack.c.b16 %v842, %v840
  %v849 = vpack.c.b16 %v843, %v841
  %v854 = vsel %vm276, %v845, 0
  %v857 = vsel %vm276, %v847, 0
  %v860 = vsel %vm276, %v849, 0
  %862 = vmatpush.bf16.msra.mxu0 %v814
  %863 = vmatpush.bf16.msra.mxu0 %v813
  %864 = vmatpush.bf16.msra.mxu0 %v812
  %865 = vmatpush.bf16.msra.mxu0 %v811
  %866 = vmatpush.bf16.msra.mxu0 %v810
  %867 = vmatpush.bf16.msra.mxu0 %v809
  %868 = vmatpush.bf16.msra.mxu0 %v808
  %869 = vmatpush.bf16.msra.mxu0 %v807
  %870 = vmatmul.bf16.gmra.mxu0 %v844
  %v871 = vpop.f32.mrf.mxu0
  %v872 = vadd.f32 0.0, %v871
  %v873 = vpop.f32.mrf.mxu0
  %v874 = vadd.f32 0.0, %v873
  %875 = vmatmul.bf16.gmra.mxu0 %v846
  %v876 = vpop.f32.mrf.mxu0
  %v877 = vadd.f32 0.0, %v876
  %v878 = vpop.f32.mrf.mxu0
  %v879 = vadd.f32 0.0, %v878
  %880 = vmatmul.bf16.gmra.mxu0 %v848
  %v881 = vpop.f32.mrf.mxu0
  %v882 = vadd.f32 0.0, %v881
  %v883 = vpop.f32.mrf.mxu0
  %v884 = vadd.f32 0.0, %v883
  %885 = vdwg.mxu0
  %886 = vmatpush.bf16.msra.mxu0 0
  %887 = vmatpush.bf16.msra.mxu0 0
  %888 = vmatpush.bf16.msra.mxu0 0
  %889 = vmatpush.bf16.msra.mxu0 0
  %890 = vmatpush.bf16.msra.mxu0 %v818
  %891 = vmatpush.bf16.msra.mxu0 %v817
  %892 = vmatpush.bf16.msra.mxu0 %v816
  %893 = vmatpush.bf16.msra.mxu0 %v815
  %894 = vmatmul.bf16.gmra.mxu0 %v854
  %v895 = vpop.f32.mrf.mxu0
  %v896 = vadd.f32 %v872, %v895
  %v897 = vpop.f32.mrf.mxu0
  %v898 = vadd.f32 %v874, %v897
  %899 = vmatmul.bf16.gmra.mxu0 %v857
  %v900 = vpop.f32.mrf.mxu0
  %v901 = vadd.f32 %v877, %v900
  %v902 = vpop.f32.mrf.mxu0
  %v903 = vadd.f32 %v879, %v902
  %904 = vmatmul.bf16.gmra.mxu0 %v860
  %v905 = vpop.f32.mrf.mxu0
  %v906 = vadd.f32 %v882, %v905
  %v907 = vpop.f32.mrf.mxu0
  %v908 = vadd.f32 %v884, %v907
  %909 = vdwg.mxu0
  %v910 = vadd.f32 %v776, %v896
  %v911 = vadd.f32 %v777, %v898
  %v912 = vadd.f32 %v778, %v901
  %v913 = vadd.f32 %v779, %v903
  %v914 = vadd.f32 %v780, %v906
  %v915 = vadd.f32 %v781, %v908
  %916 = vrot.lane.b32.xlu0 %v40, 127
  %v917 = vpop.permute.xlu0 %916
  %918 = vrot.lane.b32.xlu0 %v41, 127
  %v919 = vpop.permute.xlu0 %918
  %920 = vrot.lane.b32.xlu0 %v42, 127
  %v921 = vpop.permute.xlu0 %920
  %922 = vrot.lane.b32.xlu0 %v43, 127
  %v923 = vpop.permute.xlu0 %922
  %924 = vrot.lane.b32.xlu0 %v44, 127
  %v925 = vpop.permute.xlu0 %924
  %926 = vrot.lane.b32.xlu0 %v45, 127
  %v927 = vpop.permute.xlu0 %926
  %928 = vrot.lane.b32.xlu0 %v46, 127
  %v929 = vpop.permute.xlu0 %928
  %930 = vrot.lane.b32.xlu0 %v47, 127
  %v931 = vpop.permute.xlu0 %930
  %932 = vrot.lane.b32.xlu0 %v48, 127
  %v933 = vpop.permute.xlu0 %932
  %934 = vrot.lane.b32.xlu0 %v49, 127
  %v935 = vpop.permute.xlu0 %934
  %936 = vrot.lane.b32.xlu0 %v50, 127
  %v937 = vpop.permute.xlu0 %936
  %938 = vrot.lane.b32.xlu0 %v51, 127
  %v939 = vpop.permute.xlu0 %938
  %940 = vrot.lane.b32.xlu0 %v52, 127
  %v941 = vpop.permute.xlu0 %940
  %942 = vrot.lane.b32.xlu0 %v53, 127
  %v943 = vpop.permute.xlu0 %942
  %944 = vrot.lane.b32.xlu0 %v54, 127
  %v945 = vpop.permute.xlu0 %944
  %946 = vrot.lane.b32.xlu0 %v55, 127
  %v947 = vpop.permute.xlu0 %946
  %948 = vrot.lane.b32.xlu0 %v56, 127
  %v949 = vpop.permute.xlu0 %948
  %950 = vrot.lane.b32.xlu0 %v57, 127
  %v951 = vpop.permute.xlu0 %950
  %952 = vrot.lane.b32.xlu0 %v58, 127
  %v953 = vpop.permute.xlu0 %952
  %954 = vrot.lane.b32.xlu0 %v59, 127
  %v955 = vpop.permute.xlu0 %954
  %956 = vrot.lane.b32.xlu0 %v60, 127
  %v957 = vpop.permute.xlu0 %956
  %958 = vrot.lane.b32.xlu0 %v61, 127
  %v959 = vpop.permute.xlu0 %958
  %960 = vrot.lane.b32.xlu0 %v62, 127
  %v961 = vpop.permute.xlu0 %960
  %962 = vrot.lane.b32.xlu0 %v63, 127
  %v963 = vpop.permute.xlu0 %962
  %v964 = vperm.slane %v64, 5
  %v965 = vmul.f32 %v917, %v964
  %v966 = vmul.f32 %v919, %v964
  %v967 = vmul.f32 %v921, %v964
  %v968 = vmul.f32 %v923, %v964
  %v969 = vmul.f32 %v925, %v964
  %v970 = vmul.f32 %v927, %v964
  %v971 = vmul.f32 %v929, %v964
  %v972 = vmul.f32 %v931, %v964
  %v973 = vmul.f32 %v933, %v964
  %v974 = vmul.f32 %v935, %v964
  %v975 = vmul.f32 %v937, %v964
  %v976 = vmul.f32 %v939, %v964
  %v977 = vmul.f32 %v941, %v964
  %v978 = vmul.f32 %v943, %v964
  %v979 = vmul.f32 %v945, %v964
  %v980 = vmul.f32 %v947, %v964
  %v981 = vmul.f32 %v949, %v964
  %v982 = vmul.f32 %v951, %v964
  %v983 = vmul.f32 %v953, %v964
  %v984 = vmul.f32 %v955, %v964
  %v985 = vmul.f32 %v957, %v964
  %v986 = vmul.f32 %v959, %v964
  %v987 = vmul.f32 %v961, %v964
  %v988 = vmul.f32 %v963, %v964
  %v989 = vpack.c.bf16 %v966, %v965
  %v990 = vpack.c.bf16 %v968, %v967
  %v991 = vpack.c.bf16 %v970, %v969
  %v992 = vpack.c.bf16 %v972, %v971
  %v993 = vpack.c.bf16 %v974, %v973
  %v994 = vpack.c.bf16 %v976, %v975
  %v995 = vpack.c.bf16 %v978, %v977
  %v996 = vpack.c.bf16 %v980, %v979
  %v997 = vpack.c.bf16 %v982, %v981
  %v998 = vpack.c.bf16 %v984, %v983
  %v999 = vpack.c.bf16 %v986, %v985
  %v1000 = vpack.c.bf16 %v988, %v987
  %s1001 = scalar_lea.vmem %s1, 240
  %v1002 = vld [vmem:[%s1001] sm:$0xff]
  %v1003 = vld [vmem:[%s1001 + $0x8] sm:$0xff]
  %v1004 = vld [vmem:[%s1001 + $0x10] sm:$0xff]
  %v1005 = vld [vmem:[%s1001 + $0x18] sm:$0xff]
  %v1006 = vld [vmem:[%s1001 + $0x20] sm:$0xff]
  %v1007 = vld [vmem:[%s1001 + $0x28] sm:$0xff]
  %v1014 = vunpack.c.l.b16 %v1002
  %v1015 = vunpack.c.h.b16 %v1002
  %v1016 = vunpack.c.l.b16 %v1003
  %v1017 = vunpack.c.h.b16 %v1003
  %v1018 = vunpack.c.l.b16 %v1004
  %v1019 = vunpack.c.h.b16 %v1004
  %v1020 = vunpack.c.l.b16 %v1005
  %v1021 = vunpack.c.h.b16 %v1005
  %v1022 = vunpack.c.l.b16 %v1006
  %v1023 = vunpack.c.h.b16 %v1006
  %v1024 = vunpack.c.l.b16 %v1007
  %v1025 = vunpack.c.h.b16 %v1007
  %v1026 = vpack.c.b16 %v1016, %v1014
  %v1027 = vpack.c.b16 %v1017, %v1015
  %v1028 = vpack.c.b16 %v1020, %v1018
  %v1029 = vpack.c.b16 %v1021, %v1019
  %v1030 = vpack.c.b16 %v1024, %v1022
  %v1031 = vpack.c.b16 %v1025, %v1023
  %v1036 = vsel %vm276, %v1027, 0
  %v1039 = vsel %vm276, %v1029, 0
  %v1042 = vsel %vm276, %v1031, 0
  %1044 = vmatpush.bf16.msra.mxu0 %v996
  %1045 = vmatpush.bf16.msra.mxu0 %v995
  %1046 = vmatpush.bf16.msra.mxu0 %v994
  %1047 = vmatpush.bf16.msra.mxu0 %v993
  %1048 = vmatpush.bf16.msra.mxu0 %v992
  %1049 = vmatpush.bf16.msra.mxu0 %v991
  %1050 = vmatpush.bf16.msra.mxu0 %v990
  %1051 = vmatpush.bf16.msra.mxu0 %v989
  %1052 = vmatmul.bf16.gmra.mxu0 %v1026
  %v1053 = vpop.f32.mrf.mxu0
  %v1054 = vadd.f32 0.0, %v1053
  %v1055 = vpop.f32.mrf.mxu0
  %v1056 = vadd.f32 0.0, %v1055
  %1057 = vmatmul.bf16.gmra.mxu0 %v1028
  %v1058 = vpop.f32.mrf.mxu0
  %v1059 = vadd.f32 0.0, %v1058
  %v1060 = vpop.f32.mrf.mxu0
  %v1061 = vadd.f32 0.0, %v1060
  %1062 = vmatmul.bf16.gmra.mxu0 %v1030
  %v1063 = vpop.f32.mrf.mxu0
  %v1064 = vadd.f32 0.0, %v1063
  %v1065 = vpop.f32.mrf.mxu0
  %v1066 = vadd.f32 0.0, %v1065
  %1067 = vdwg.mxu0
  %1068 = vmatpush.bf16.msra.mxu0 0
  %1069 = vmatpush.bf16.msra.mxu0 0
  %1070 = vmatpush.bf16.msra.mxu0 0
  %1071 = vmatpush.bf16.msra.mxu0 0
  %1072 = vmatpush.bf16.msra.mxu0 %v1000
  %1073 = vmatpush.bf16.msra.mxu0 %v999
  %1074 = vmatpush.bf16.msra.mxu0 %v998
  %1075 = vmatpush.bf16.msra.mxu0 %v997
  %1076 = vmatmul.bf16.gmra.mxu0 %v1036
  %v1077 = vpop.f32.mrf.mxu0
  %v1078 = vadd.f32 %v1054, %v1077
  %v1079 = vpop.f32.mrf.mxu0
  %v1080 = vadd.f32 %v1056, %v1079
  %1081 = vmatmul.bf16.gmra.mxu0 %v1039
  %v1082 = vpop.f32.mrf.mxu0
  %v1083 = vadd.f32 %v1059, %v1082
  %v1084 = vpop.f32.mrf.mxu0
  %v1085 = vadd.f32 %v1061, %v1084
  %1086 = vmatmul.bf16.gmra.mxu0 %v1042
  %v1087 = vpop.f32.mrf.mxu0
  %v1088 = vadd.f32 %v1064, %v1087
  %v1089 = vpop.f32.mrf.mxu0
  %v1090 = vadd.f32 %v1066, %v1089
  %1091 = vdwg.mxu0
  %v1092 = vadd.f32 %v910, %v1078
  %v1093 = vadd.f32 %v911, %v1080
  %v1094 = vadd.f32 %v912, %v1083
  %v1095 = vadd.f32 %v913, %v1085
  %v1096 = vadd.f32 %v914, %v1088
  %v1097 = vadd.f32 %v915, %v1090
  %1098 = vrot.lane.b32.xlu0 %v40, 122
  %v1099 = vpop.permute.xlu0 %1098
  %1100 = vrot.lane.b32.xlu0 %v41, 122
  %v1101 = vpop.permute.xlu0 %1100
  %1102 = vrot.lane.b32.xlu0 %v42, 122
  %v1103 = vpop.permute.xlu0 %1102
  %1104 = vrot.lane.b32.xlu0 %v43, 122
  %v1105 = vpop.permute.xlu0 %1104
  %1106 = vrot.lane.b32.xlu0 %v44, 122
  %v1107 = vpop.permute.xlu0 %1106
  %1108 = vrot.lane.b32.xlu0 %v45, 122
  %v1109 = vpop.permute.xlu0 %1108
  %1110 = vrot.lane.b32.xlu0 %v46, 122
  %v1111 = vpop.permute.xlu0 %1110
  %1112 = vrot.lane.b32.xlu0 %v47, 122
  %v1113 = vpop.permute.xlu0 %1112
  %1114 = vrot.lane.b32.xlu0 %v48, 122
  %v1115 = vpop.permute.xlu0 %1114
  %1116 = vrot.lane.b32.xlu0 %v49, 122
  %v1117 = vpop.permute.xlu0 %1116
  %1118 = vrot.lane.b32.xlu0 %v50, 122
  %v1119 = vpop.permute.xlu0 %1118
  %1120 = vrot.lane.b32.xlu0 %v51, 122
  %v1121 = vpop.permute.xlu0 %1120
  %1122 = vrot.lane.b32.xlu0 %v52, 122
  %v1123 = vpop.permute.xlu0 %1122
  %1124 = vrot.lane.b32.xlu0 %v53, 122
  %v1125 = vpop.permute.xlu0 %1124
  %1126 = vrot.lane.b32.xlu0 %v54, 122
  %v1127 = vpop.permute.xlu0 %1126
  %1128 = vrot.lane.b32.xlu0 %v55, 122
  %v1129 = vpop.permute.xlu0 %1128
  %1130 = vrot.lane.b32.xlu0 %v56, 122
  %v1131 = vpop.permute.xlu0 %1130
  %1132 = vrot.lane.b32.xlu0 %v57, 122
  %v1133 = vpop.permute.xlu0 %1132
  %1134 = vrot.lane.b32.xlu0 %v58, 122
  %v1135 = vpop.permute.xlu0 %1134
  %1136 = vrot.lane.b32.xlu0 %v59, 122
  %v1137 = vpop.permute.xlu0 %1136
  %1138 = vrot.lane.b32.xlu0 %v60, 122
  %v1139 = vpop.permute.xlu0 %1138
  %1140 = vrot.lane.b32.xlu0 %v61, 122
  %v1141 = vpop.permute.xlu0 %1140
  %1142 = vrot.lane.b32.xlu0 %v62, 122
  %v1143 = vpop.permute.xlu0 %1142
  %1144 = vrot.lane.b32.xlu0 %v63, 122
  %v1145 = vpop.permute.xlu0 %1144
  %v1146 = vperm.slane %v64, 6
  %v1147 = vmul.f32 %v1099, %v1146
  %v1148 = vmul.f32 %v1101, %v1146
  %v1149 = vmul.f32 %v1103, %v1146
  %v1150 = vmul.f32 %v1105, %v1146
  %v1151 = vmul.f32 %v1107, %v1146
  %v1152 = vmul.f32 %v1109, %v1146
  %v1153 = vmul.f32 %v1111, %v1146
  %v1154 = vmul.f32 %v1113, %v1146
  %v1155 = vmul.f32 %v1115, %v1146
  %v1156 = vmul.f32 %v1117, %v1146
  %v1157 = vmul.f32 %v1119, %v1146
  %v1158 = vmul.f32 %v1121, %v1146
  %v1159 = vmul.f32 %v1123, %v1146
  %v1160 = vmul.f32 %v1125, %v1146
  %v1161 = vmul.f32 %v1127, %v1146
  %v1162 = vmul.f32 %v1129, %v1146
  %v1163 = vmul.f32 %v1131, %v1146
  %v1164 = vmul.f32 %v1133, %v1146
  %v1165 = vmul.f32 %v1135, %v1146
  %v1166 = vmul.f32 %v1137, %v1146
  %v1167 = vmul.f32 %v1139, %v1146
  %v1168 = vmul.f32 %v1141, %v1146
  %v1169 = vmul.f32 %v1143, %v1146
  %v1170 = vmul.f32 %v1145, %v1146
  %v1171 = vpack.c.bf16 %v1148, %v1147
  %v1172 = vpack.c.bf16 %v1150, %v1149
  %v1173 = vpack.c.bf16 %v1152, %v1151
  %v1174 = vpack.c.bf16 %v1154, %v1153
  %v1175 = vpack.c.bf16 %v1156, %v1155
  %v1176 = vpack.c.bf16 %v1158, %v1157
  %v1177 = vpack.c.bf16 %v1160, %v1159
  %v1178 = vpack.c.bf16 %v1162, %v1161
  %v1179 = vpack.c.bf16 %v1164, %v1163
  %v1180 = vpack.c.bf16 %v1166, %v1165
  %v1181 = vpack.c.bf16 %v1168, %v1167
  %v1182 = vpack.c.bf16 %v1170, %v1169
  %s1183 = scalar_lea.vmem %s1, 288
  %v1184 = vld [vmem:[%s1183] sm:$0xff]
  %v1185 = vld [vmem:[%s1183 + $0x8] sm:$0xff]
  %v1186 = vld [vmem:[%s1183 + $0x10] sm:$0xff]
  %v1187 = vld [vmem:[%s1183 + $0x18] sm:$0xff]
  %v1188 = vld [vmem:[%s1183 + $0x20] sm:$0xff]
  %v1189 = vld [vmem:[%s1183 + $0x28] sm:$0xff]
  %v1196 = vunpack.c.l.b16 %v1184
  %v1197 = vunpack.c.h.b16 %v1184
  %v1198 = vunpack.c.l.b16 %v1185
  %v1199 = vunpack.c.h.b16 %v1185
  %v1200 = vunpack.c.l.b16 %v1186
  %v1201 = vunpack.c.h.b16 %v1186
  %v1202 = vunpack.c.l.b16 %v1187
  %v1203 = vunpack.c.h.b16 %v1187
  %v1204 = vunpack.c.l.b16 %v1188
  %v1205 = vunpack.c.h.b16 %v1188
  %v1206 = vunpack.c.l.b16 %v1189
  %v1207 = vunpack.c.h.b16 %v1189
  %v1208 = vpack.c.b16 %v1198, %v1196
  %v1209 = vpack.c.b16 %v1199, %v1197
  %v1210 = vpack.c.b16 %v1202, %v1200
  %v1211 = vpack.c.b16 %v1203, %v1201
  %v1212 = vpack.c.b16 %v1206, %v1204
  %v1213 = vpack.c.b16 %v1207, %v1205
  %v1218 = vsel %vm276, %v1209, 0
  %v1221 = vsel %vm276, %v1211, 0
  %v1224 = vsel %vm276, %v1213, 0
  %1226 = vmatpush.bf16.msra.mxu0 %v1178
  %1227 = vmatpush.bf16.msra.mxu0 %v1177
  %1228 = vmatpush.bf16.msra.mxu0 %v1176
  %1229 = vmatpush.bf16.msra.mxu0 %v1175
  %1230 = vmatpush.bf16.msra.mxu0 %v1174
  %1231 = vmatpush.bf16.msra.mxu0 %v1173
  %1232 = vmatpush.bf16.msra.mxu0 %v1172
  %1233 = vmatpush.bf16.msra.mxu0 %v1171
  %1234 = vmatmul.bf16.gmra.mxu0 %v1208
  %v1235 = vpop.f32.mrf.mxu0
  %v1236 = vadd.f32 0.0, %v1235
  %v1237 = vpop.f32.mrf.mxu0
  %v1238 = vadd.f32 0.0, %v1237
  %1239 = vmatmul.bf16.gmra.mxu0 %v1210
  %v1240 = vpop.f32.mrf.mxu0
  %v1241 = vadd.f32 0.0, %v1240
  %v1242 = vpop.f32.mrf.mxu0
  %v1243 = vadd.f32 0.0, %v1242
  %1244 = vmatmul.bf16.gmra.mxu0 %v1212
  %v1245 = vpop.f32.mrf.mxu0
  %v1246 = vadd.f32 0.0, %v1245
  %v1247 = vpop.f32.mrf.mxu0
  %v1248 = vadd.f32 0.0, %v1247
  %1249 = vdwg.mxu0
  %1250 = vmatpush.bf16.msra.mxu0 0
  %1251 = vmatpush.bf16.msra.mxu0 0
  %1252 = vmatpush.bf16.msra.mxu0 0
  %1253 = vmatpush.bf16.msra.mxu0 0
  %1254 = vmatpush.bf16.msra.mxu0 %v1182
  %1255 = vmatpush.bf16.msra.mxu0 %v1181
  %1256 = vmatpush.bf16.msra.mxu0 %v1180
  %1257 = vmatpush.bf16.msra.mxu0 %v1179
  %1258 = vmatmul.bf16.gmra.mxu0 %v1218
  %v1259 = vpop.f32.mrf.mxu0
  %v1260 = vadd.f32 %v1236, %v1259
  %v1261 = vpop.f32.mrf.mxu0
  %v1262 = vadd.f32 %v1238, %v1261
  %1263 = vmatmul.bf16.gmra.mxu0 %v1221
  %v1264 = vpop.f32.mrf.mxu0
  %v1265 = vadd.f32 %v1241, %v1264
  %v1266 = vpop.f32.mrf.mxu0
  %v1267 = vadd.f32 %v1243, %v1266
  %1268 = vmatmul.bf16.gmra.mxu0 %v1224
  %v1269 = vpop.f32.mrf.mxu0
  %v1270 = vadd.f32 %v1246, %v1269
  %v1271 = vpop.f32.mrf.mxu0
  %v1272 = vadd.f32 %v1248, %v1271
  %1273 = vdwg.mxu0
  %v1274 = vadd.f32 %v1092, %v1260
  %v1275 = vadd.f32 %v1093, %v1262
  %v1276 = vadd.f32 %v1094, %v1265
  %v1277 = vadd.f32 %v1095, %v1267
  %v1278 = vadd.f32 %v1096, %v1270
  %v1279 = vadd.f32 %v1097, %v1272
  %1280 = vrot.lane.b32.xlu0 %v40, 121
  %v1281 = vpop.permute.xlu0 %1280
  %1282 = vrot.lane.b32.xlu0 %v41, 121
  %v1283 = vpop.permute.xlu0 %1282
  %1284 = vrot.lane.b32.xlu0 %v42, 121
  %v1285 = vpop.permute.xlu0 %1284
  %1286 = vrot.lane.b32.xlu0 %v43, 121
  %v1287 = vpop.permute.xlu0 %1286
  %1288 = vrot.lane.b32.xlu0 %v44, 121
  %v1289 = vpop.permute.xlu0 %1288
  %1290 = vrot.lane.b32.xlu0 %v45, 121
  %v1291 = vpop.permute.xlu0 %1290
  %1292 = vrot.lane.b32.xlu0 %v46, 121
  %v1293 = vpop.permute.xlu0 %1292
  %1294 = vrot.lane.b32.xlu0 %v47, 121
  %v1295 = vpop.permute.xlu0 %1294
  %1296 = vrot.lane.b32.xlu0 %v48, 121
  %v1297 = vpop.permute.xlu0 %1296
  %1298 = vrot.lane.b32.xlu0 %v49, 121
  %v1299 = vpop.permute.xlu0 %1298
  %1300 = vrot.lane.b32.xlu0 %v50, 121
  %v1301 = vpop.permute.xlu0 %1300
  %1302 = vrot.lane.b32.xlu0 %v51, 121
  %v1303 = vpop.permute.xlu0 %1302
  %1304 = vrot.lane.b32.xlu0 %v52, 121
  %v1305 = vpop.permute.xlu0 %1304
  %1306 = vrot.lane.b32.xlu0 %v53, 121
  %v1307 = vpop.permute.xlu0 %1306
  %1308 = vrot.lane.b32.xlu0 %v54, 121
  %v1309 = vpop.permute.xlu0 %1308
  %1310 = vrot.lane.b32.xlu0 %v55, 121
  %v1311 = vpop.permute.xlu0 %1310
  %1312 = vrot.lane.b32.xlu0 %v56, 121
  %v1313 = vpop.permute.xlu0 %1312
  %1314 = vrot.lane.b32.xlu0 %v57, 121
  %v1315 = vpop.permute.xlu0 %1314
  %1316 = vrot.lane.b32.xlu0 %v58, 121
  %v1317 = vpop.permute.xlu0 %1316
  %1318 = vrot.lane.b32.xlu0 %v59, 121
  %v1319 = vpop.permute.xlu0 %1318
  %1320 = vrot.lane.b32.xlu0 %v60, 121
  %v1321 = vpop.permute.xlu0 %1320
  %1322 = vrot.lane.b32.xlu0 %v61, 121
  %v1323 = vpop.permute.xlu0 %1322
  %1324 = vrot.lane.b32.xlu0 %v62, 121
  %v1325 = vpop.permute.xlu0 %1324
  %1326 = vrot.lane.b32.xlu0 %v63, 121
  %v1327 = vpop.permute.xlu0 %1326
  %v1328 = vperm.slane %v64, 7
  %v1329 = vmul.f32 %v1281, %v1328
  %v1330 = vmul.f32 %v1283, %v1328
  %v1331 = vmul.f32 %v1285, %v1328
  %v1332 = vmul.f32 %v1287, %v1328
  %v1333 = vmul.f32 %v1289, %v1328
  %v1334 = vmul.f32 %v1291, %v1328
  %v1335 = vmul.f32 %v1293, %v1328
  %v1336 = vmul.f32 %v1295, %v1328
  %v1337 = vmul.f32 %v1297, %v1328
  %v1338 = vmul.f32 %v1299, %v1328
  %v1339 = vmul.f32 %v1301, %v1328
  %v1340 = vmul.f32 %v1303, %v1328
  %v1341 = vmul.f32 %v1305, %v1328
  %v1342 = vmul.f32 %v1307, %v1328
  %v1343 = vmul.f32 %v1309, %v1328
  %v1344 = vmul.f32 %v1311, %v1328
  %v1345 = vmul.f32 %v1313, %v1328
  %v1346 = vmul.f32 %v1315, %v1328
  %v1347 = vmul.f32 %v1317, %v1328
  %v1348 = vmul.f32 %v1319, %v1328
  %v1349 = vmul.f32 %v1321, %v1328
  %v1350 = vmul.f32 %v1323, %v1328
  %v1351 = vmul.f32 %v1325, %v1328
  %v1352 = vmul.f32 %v1327, %v1328
  %v1353 = vpack.c.bf16 %v1330, %v1329
  %v1354 = vpack.c.bf16 %v1332, %v1331
  %v1355 = vpack.c.bf16 %v1334, %v1333
  %v1356 = vpack.c.bf16 %v1336, %v1335
  %v1357 = vpack.c.bf16 %v1338, %v1337
  %v1358 = vpack.c.bf16 %v1340, %v1339
  %v1359 = vpack.c.bf16 %v1342, %v1341
  %v1360 = vpack.c.bf16 %v1344, %v1343
  %v1361 = vpack.c.bf16 %v1346, %v1345
  %v1362 = vpack.c.bf16 %v1348, %v1347
  %v1363 = vpack.c.bf16 %v1350, %v1349
  %v1364 = vpack.c.bf16 %v1352, %v1351
  %s1365 = scalar_lea.vmem %s1, 336
  %v1366 = vld [vmem:[%s1365] sm:$0xff]
  %v1367 = vld [vmem:[%s1365 + $0x8] sm:$0xff]
  %v1368 = vld [vmem:[%s1365 + $0x10] sm:$0xff]
  %v1369 = vld [vmem:[%s1365 + $0x18] sm:$0xff]
  %v1370 = vld [vmem:[%s1365 + $0x20] sm:$0xff]
  %v1371 = vld [vmem:[%s1365 + $0x28] sm:$0xff]
  %v1378 = vunpack.c.l.b16 %v1366
  %v1379 = vunpack.c.h.b16 %v1366
  %v1380 = vunpack.c.l.b16 %v1367
  %v1381 = vunpack.c.h.b16 %v1367
  %v1382 = vunpack.c.l.b16 %v1368
  %v1383 = vunpack.c.h.b16 %v1368
  %v1384 = vunpack.c.l.b16 %v1369
  %v1385 = vunpack.c.h.b16 %v1369
  %v1386 = vunpack.c.l.b16 %v1370
  %v1387 = vunpack.c.h.b16 %v1370
  %v1388 = vunpack.c.l.b16 %v1371
  %v1389 = vunpack.c.h.b16 %v1371
  %v1390 = vpack.c.b16 %v1380, %v1378
  %v1391 = vpack.c.b16 %v1381, %v1379
  %v1392 = vpack.c.b16 %v1384, %v1382
  %v1393 = vpack.c.b16 %v1385, %v1383
  %v1394 = vpack.c.b16 %v1388, %v1386
  %v1395 = vpack.c.b16 %v1389, %v1387
  %v1400 = vsel %vm276, %v1391, 0
  %v1403 = vsel %vm276, %v1393, 0
  %v1406 = vsel %vm276, %v1395, 0
  %1408 = vmatpush.bf16.msra.mxu0 %v1360
  %1409 = vmatpush.bf16.msra.mxu0 %v1359
  %1410 = vmatpush.bf16.msra.mxu0 %v1358
  %1411 = vmatpush.bf16.msra.mxu0 %v1357
  %1412 = vmatpush.bf16.msra.mxu0 %v1356
  %1413 = vmatpush.bf16.msra.mxu0 %v1355
  %1414 = vmatpush.bf16.msra.mxu0 %v1354
  %1415 = vmatpush.bf16.msra.mxu0 %v1353
  %1416 = vmatmul.bf16.gmra.mxu0 %v1390
  %v1417 = vpop.f32.mrf.mxu0
  %v1418 = vadd.f32 0.0, %v1417
  %v1419 = vpop.f32.mrf.mxu0
  %v1420 = vadd.f32 0.0, %v1419
  %1421 = vmatmul.bf16.gmra.mxu0 %v1392
  %v1422 = vpop.f32.mrf.mxu0
  %v1423 = vadd.f32 0.0, %v1422
  %v1424 = vpop.f32.mrf.mxu0
  %v1425 = vadd.f32 0.0, %v1424
  %1426 = vmatmul.bf16.gmra.mxu0 %v1394
  %v1427 = vpop.f32.mrf.mxu0
  %v1428 = vadd.f32 0.0, %v1427
  %v1429 = vpop.f32.mrf.mxu0
  %v1430 = vadd.f32 0.0, %v1429
  %1431 = vdwg.mxu0
  %1432 = vmatpush.bf16.msra.mxu0 0
  %1433 = vmatpush.bf16.msra.mxu0 0
  %1434 = vmatpush.bf16.msra.mxu0 0
  %1435 = vmatpush.bf16.msra.mxu0 0
  %1436 = vmatpush.bf16.msra.mxu0 %v1364
  %1437 = vmatpush.bf16.msra.mxu0 %v1363
  %1438 = vmatpush.bf16.msra.mxu0 %v1362
  %1439 = vmatpush.bf16.msra.mxu0 %v1361
  %1440 = vmatmul.bf16.gmra.mxu0 %v1400
  %v1441 = vpop.f32.mrf.mxu0
  %v1442 = vadd.f32 %v1418, %v1441
  %v1443 = vpop.f32.mrf.mxu0
  %v1444 = vadd.f32 %v1420, %v1443
  %1445 = vmatmul.bf16.gmra.mxu0 %v1403
  %v1446 = vpop.f32.mrf.mxu0
  %v1447 = vadd.f32 %v1423, %v1446
  %v1448 = vpop.f32.mrf.mxu0
  %v1449 = vadd.f32 %v1425, %v1448
  %1450 = vmatmul.bf16.gmra.mxu0 %v1406
  %v1451 = vpop.f32.mrf.mxu0
  %v1452 = vadd.f32 %v1428, %v1451
  %v1453 = vpop.f32.mrf.mxu0
  %v1454 = vadd.f32 %v1430, %v1453
  %1455 = vdwg.mxu0
  %v1456 = vadd.f32 %v1274, %v1442
  %v1457 = vadd.f32 %v1275, %v1444
  %v1458 = vadd.f32 %v1276, %v1447
  %v1459 = vadd.f32 %v1277, %v1449
  %v1460 = vadd.f32 %v1278, %v1452
  %v1461 = vadd.f32 %v1279, %v1454
  %1462 = vrot.lane.b32.xlu0 %v40, 120
  %v1463 = vpop.permute.xlu0 %1462
  %1464 = vrot.lane.b32.xlu0 %v41, 120
  %v1465 = vpop.permute.xlu0 %1464
  %1466 = vrot.lane.b32.xlu0 %v42, 120
  %v1467 = vpop.permute.xlu0 %1466
  %1468 = vrot.lane.b32.xlu0 %v43, 120
  %v1469 = vpop.permute.xlu0 %1468
  %1470 = vrot.lane.b32.xlu0 %v44, 120
  %v1471 = vpop.permute.xlu0 %1470
  %1472 = vrot.lane.b32.xlu0 %v45, 120
  %v1473 = vpop.permute.xlu0 %1472
  %1474 = vrot.lane.b32.xlu0 %v46, 120
  %v1475 = vpop.permute.xlu0 %1474
  %1476 = vrot.lane.b32.xlu0 %v47, 120
  %v1477 = vpop.permute.xlu0 %1476
  %1478 = vrot.lane.b32.xlu0 %v48, 120
  %v1479 = vpop.permute.xlu0 %1478
  %1480 = vrot.lane.b32.xlu0 %v49, 120
  %v1481 = vpop.permute.xlu0 %1480
  %1482 = vrot.lane.b32.xlu0 %v50, 120
  %v1483 = vpop.permute.xlu0 %1482
  %1484 = vrot.lane.b32.xlu0 %v51, 120
  %v1485 = vpop.permute.xlu0 %1484
  %1486 = vrot.lane.b32.xlu0 %v52, 120
  %v1487 = vpop.permute.xlu0 %1486
  %1488 = vrot.lane.b32.xlu0 %v53, 120
  %v1489 = vpop.permute.xlu0 %1488
  %1490 = vrot.lane.b32.xlu0 %v54, 120
  %v1491 = vpop.permute.xlu0 %1490
  %1492 = vrot.lane.b32.xlu0 %v55, 120
  %v1493 = vpop.permute.xlu0 %1492
  %1494 = vrot.lane.b32.xlu0 %v56, 120
  %v1495 = vpop.permute.xlu0 %1494
  %1496 = vrot.lane.b32.xlu0 %v57, 120
  %v1497 = vpop.permute.xlu0 %1496
  %1498 = vrot.lane.b32.xlu0 %v58, 120
  %v1499 = vpop.permute.xlu0 %1498
  %1500 = vrot.lane.b32.xlu0 %v59, 120
  %v1501 = vpop.permute.xlu0 %1500
  %1502 = vrot.lane.b32.xlu0 %v60, 120
  %v1503 = vpop.permute.xlu0 %1502
  %1504 = vrot.lane.b32.xlu0 %v61, 120
  %v1505 = vpop.permute.xlu0 %1504
  %1506 = vrot.lane.b32.xlu0 %v62, 120
  %v1507 = vpop.permute.xlu0 %1506
  %1508 = vrot.lane.b32.xlu0 %v63, 120
  %v1509 = vpop.permute.xlu0 %1508
  %v1510 = vperm.slane %v65, 0
  %v1511 = vmul.f32 %v1463, %v1510
  %v1512 = vmul.f32 %v1465, %v1510
  %v1513 = vmul.f32 %v1467, %v1510
  %v1514 = vmul.f32 %v1469, %v1510
  %v1515 = vmul.f32 %v1471, %v1510
  %v1516 = vmul.f32 %v1473, %v1510
  %v1517 = vmul.f32 %v1475, %v1510
  %v1518 = vmul.f32 %v1477, %v1510
  %v1519 = vmul.f32 %v1479, %v1510
  %v1520 = vmul.f32 %v1481, %v1510
  %v1521 = vmul.f32 %v1483, %v1510
  %v1522 = vmul.f32 %v1485, %v1510
  %v1523 = vmul.f32 %v1487, %v1510
  %v1524 = vmul.f32 %v1489, %v1510
  %v1525 = vmul.f32 %v1491, %v1510
  %v1526 = vmul.f32 %v1493, %v1510
  %v1527 = vmul.f32 %v1495, %v1510
  %v1528 = vmul.f32 %v1497, %v1510
  %v1529 = vmul.f32 %v1499, %v1510
  %v1530 = vmul.f32 %v1501, %v1510
  %v1531 = vmul.f32 %v1503, %v1510
  %v1532 = vmul.f32 %v1505, %v1510
  %v1533 = vmul.f32 %v1507, %v1510
  %v1534 = vmul.f32 %v1509, %v1510
  %v1535 = vpack.c.bf16 %v1512, %v1511
  %v1536 = vpack.c.bf16 %v1514, %v1513
  %v1537 = vpack.c.bf16 %v1516, %v1515
  %v1538 = vpack.c.bf16 %v1518, %v1517
  %v1539 = vpack.c.bf16 %v1520, %v1519
  %v1540 = vpack.c.bf16 %v1522, %v1521
  %v1541 = vpack.c.bf16 %v1524, %v1523
  %v1542 = vpack.c.bf16 %v1526, %v1525
  %v1543 = vpack.c.bf16 %v1528, %v1527
  %v1544 = vpack.c.bf16 %v1530, %v1529
  %v1545 = vpack.c.bf16 %v1532, %v1531
  %v1546 = vpack.c.bf16 %v1534, %v1533
  %s1547 = scalar_lea.vmem %s1, 384
  %v1548 = vld [vmem:[%s1547] sm:$0xff]
  %v1549 = vld [vmem:[%s1547 + $0x8] sm:$0xff]
  %v1550 = vld [vmem:[%s1547 + $0x10] sm:$0xff]
  %v1551 = vld [vmem:[%s1547 + $0x18] sm:$0xff]
  %v1552 = vld [vmem:[%s1547 + $0x20] sm:$0xff]
  %v1553 = vld [vmem:[%s1547 + $0x28] sm:$0xff]
  %v1560 = vunpack.c.l.b16 %v1548
  %v1561 = vunpack.c.h.b16 %v1548
  %v1562 = vunpack.c.l.b16 %v1549
  %v1563 = vunpack.c.h.b16 %v1549
  %v1564 = vunpack.c.l.b16 %v1550
  %v1565 = vunpack.c.h.b16 %v1550
  %v1566 = vunpack.c.l.b16 %v1551
  %v1567 = vunpack.c.h.b16 %v1551
  %v1568 = vunpack.c.l.b16 %v1552
  %v1569 = vunpack.c.h.b16 %v1552
  %v1570 = vunpack.c.l.b16 %v1553
  %v1571 = vunpack.c.h.b16 %v1553
  %v1572 = vpack.c.b16 %v1562, %v1560
  %v1573 = vpack.c.b16 %v1563, %v1561
  %v1574 = vpack.c.b16 %v1566, %v1564
  %v1575 = vpack.c.b16 %v1567, %v1565
  %v1576 = vpack.c.b16 %v1570, %v1568
  %v1577 = vpack.c.b16 %v1571, %v1569
  %v1582 = vsel %vm276, %v1573, 0
  %v1585 = vsel %vm276, %v1575, 0
  %v1588 = vsel %vm276, %v1577, 0
  %1590 = vmatpush.bf16.msra.mxu0 %v1542
  %1591 = vmatpush.bf16.msra.mxu0 %v1541
  %1592 = vmatpush.bf16.msra.mxu0 %v1540
  %1593 = vmatpush.bf16.msra.mxu0 %v1539
  %1594 = vmatpush.bf16.msra.mxu0 %v1538
  %1595 = vmatpush.bf16.msra.mxu0 %v1537
  %1596 = vmatpush.bf16.msra.mxu0 %v1536
  %1597 = vmatpush.bf16.msra.mxu0 %v1535
  %1598 = vmatmul.bf16.gmra.mxu0 %v1572
  %v1599 = vpop.f32.mrf.mxu0
  %v1600 = vadd.f32 0.0, %v1599
  %v1601 = vpop.f32.mrf.mxu0
  %v1602 = vadd.f32 0.0, %v1601
  %1603 = vmatmul.bf16.gmra.mxu0 %v1574
  %v1604 = vpop.f32.mrf.mxu0
  %v1605 = vadd.f32 0.0, %v1604
  %v1606 = vpop.f32.mrf.mxu0
  %v1607 = vadd.f32 0.0, %v1606
  %1608 = vmatmul.bf16.gmra.mxu0 %v1576
  %v1609 = vpop.f32.mrf.mxu0
  %v1610 = vadd.f32 0.0, %v1609
  %v1611 = vpop.f32.mrf.mxu0
  %v1612 = vadd.f32 0.0, %v1611
  %1613 = vdwg.mxu0
  %1614 = vmatpush.bf16.msra.mxu0 0
  %1615 = vmatpush.bf16.msra.mxu0 0
  %1616 = vmatpush.bf16.msra.mxu0 0
  %1617 = vmatpush.bf16.msra.mxu0 0
  %1618 = vmatpush.bf16.msra.mxu0 %v1546
  %1619 = vmatpush.bf16.msra.mxu0 %v1545
  %1620 = vmatpush.bf16.msra.mxu0 %v1544
  %1621 = vmatpush.bf16.msra.mxu0 %v1543
  %1622 = vmatmul.bf16.gmra.mxu0 %v1582
  %v1623 = vpop.f32.mrf.mxu0
  %v1624 = vadd.f32 %v1600, %v1623
  %v1625 = vpop.f32.mrf.mxu0
  %v1626 = vadd.f32 %v1602, %v1625
  %1627 = vmatmul.bf16.gmra.mxu0 %v1585
  %v1628 = vpop.f32.mrf.mxu0
  %v1629 = vadd.f32 %v1605, %v1628
  %v1630 = vpop.f32.mrf.mxu0
  %v1631 = vadd.f32 %v1607, %v1630
  %1632 = vmatmul.bf16.gmra.mxu0 %v1588
  %v1633 = vpop.f32.mrf.mxu0
  %v1634 = vadd.f32 %v1610, %v1633
  %v1635 = vpop.f32.mrf.mxu0
  %v1636 = vadd.f32 %v1612, %v1635
  %1637 = vdwg.mxu0
  %v1638 = vadd.f32 %v1456, %v1624
  %v1639 = vadd.f32 %v1457, %v1626
  %v1640 = vadd.f32 %v1458, %v1629
  %v1641 = vadd.f32 %v1459, %v1631
  %v1642 = vadd.f32 %v1460, %v1634
  %v1643 = vadd.f32 %v1461, %v1636
  %1644 = vst [vmem:[%s3] sm:$0xff] %v1638
  %1645 = vst [vmem:[%s3 + $0x8] sm:$0xff] %v1639
  %1646 = vst [vmem:[%s3 + $0x10] sm:$0xff] %v1640
  %1647 = vst [vmem:[%s3 + $0x18] sm:$0xff] %v1641
  %1648 = vst [vmem:[%s3 + $0x20] sm:$0xff] %v1642
  %1649 = vst [vmem:[%s3 + $0x28] sm:$0xff] %v1643
  // Predicated region
  $region14: #{conv2d_forward.1} parent=0 // pred_check
    _
  $region15: #{conv2d_forward.1} parent=0 // pred_check_branch
    %1651 = sbr.rel (0) target = $region17
  $region16: #{conv2d_forward.1} parent=0 // pred_region
    _
  $region17: #{conv2d_forward.1} parent=0 // pred_fallthru
    _
  // Predicated region
  $region18: #{conv2d_forward.1} parent=0 // pred_check
    _
  $region19: #{conv2d_forward.1} parent=0 // pred_check_branch
    %1653 = sbr.rel (0) target = $region21
  $region20: #{conv2d_forward.1} parent=0 // pred_region
    _
  $region21: #{conv2d_forward.1} parent=0 // pred_fallthru
    _

</llo_original>
